<compile_context>
chip_gen: v5e
topology: v5e:2x2
jax: 0.10.0
libtpu: 0.0.40
codegen_flags: <defaults>
</compile_context>

<pallas_src>
import functools

import numpy as np
import jax
import jax.numpy as jnp
from jax.experimental import pallas as pl
from jax.experimental.pallas import tpu as pltpu

EPS = 1e-5


# --------------------------------------------------------------------------- #
# Kernels
# --------------------------------------------------------------------------- #
def _trunk_kernel(*refs, apply_transform, relu_last, c3_tile):
    """conv1+BN+ReLU -> conv2+BN+ReLU -> conv3 (BN scale in weights) ->
    per-batch max over N points -> shift (+ReLU for the STN trunk).

    Handles TB batch elements per grid step; x is channels-first (TB, Cin, N).
    """
    if apply_transform:
        (x_ref, trans_ref,
         w1_ref, t1_ref, w2_ref, t2_ref, w3_ref, t3_ref, o_ref) = refs
    else:
        (x_ref,
         w1_ref, t1_ref, w2_ref, t2_ref, w3_ref, t3_ref, o_ref) = refs
        trans_ref = None

    TB, Cin, N = x_ref.shape
    x = x_ref[...]                                              # (TB, Cin, N) f32
    w1 = w1_ref[...]                                            # (C1, Cin) f32, BN scale folded
    C1 = w1.shape[0]

    # ---- layer-1 weight columns; optionally fold the per-batch 3x3 input
    #      transform into them:  w1eff[b] = w1 @ trans[b].T  (tiny, VPU).
    if apply_transform:
        tr = trans_ref[...]                                     # (TB, Cin, Cin)
        w1cols = []
        for k in range(Cin):
            col = tr[:, k:k + 1, 0:1] * w1[None, :, 0:1]        # (TB, C1, 1)
            for d in range(1, Cin):
                col = col + tr[:, k:k + 1, d:d + 1] * w1[None, :, d:d + 1]
            w1cols.append(col)
    else:
        w1cols = [w1[None, :, k:k + 1] for k in range(Cin)]     # (1, C1, 1)

    # ---- layer 1: K=Cin (=3) outer-product FMAs on the VPU, channels-first
    #      (x stays lane-dense in N), fused per-channel shift + ReLU.
    h = w1cols[0] * x[:, 0:1, :]
    for k in range(1, Cin):
        h = h + w1cols[k] * x[:, k:k + 1, :]
    h = jnp.maximum(h + t1_ref[...][None], 0.0)                 # (TB, C1, N)

    # One small XLU transpose of the (C1, N) layer-1 output per batch so the
    # point rows become sublane-major for the MXU layers and the max-pool.
    h = jnp.transpose(h, (0, 2, 1)).reshape(TB * N, C1).astype(jnp.bfloat16)

    # ---- layer 2: bf16 MXU matmul, f32 accum; BN scale pre-folded into w2.
    h2 = jnp.dot(h, w2_ref[...], preferred_element_type=jnp.float32)   # (TB*N, C2)
    h2 = jnp.maximum(h2 + t2_ref[...], 0.0).astype(jnp.bfloat16)

    # ---- layer 3 + max-pool, tiled over the 1024 output channels so the full
    #      (TB*N, 1024) f32 intermediate never materializes.  BN scale is in
    #      the weights; the per-channel shift (and the STN-trunk ReLU) is
    #      applied AFTER the pool — exact, both commute with max over points.
    C3 = w3_ref.shape[1]
    assert C3 % c3_tile == 0
    for c0 in range(0, C3, c3_tile):
        hc = jnp.dot(h2, w3_ref[:, c0:c0 + c3_tile],
                     preferred_element_type=jnp.float32)        # (TB*N, c3_tile)
        pooled = jnp.max(hc.reshape(TB, N, c3_tile), axis=1)    # (TB, c3_tile)
        pooled = pooled + t3_ref[:, c0:c0 + c3_tile]
        if relu_last:
            pooled = jnp.maximum(pooled, 0.0)
        o_ref[:, c0:c0 + c3_tile] = pooled                      # dense (TB, c3_tile) store


def _stn_head_kernel(v_ref, w4_ref, t4_ref, w5_ref, t5_ref, w6_ref, b6_ref, o_ref):
    """fc1+BN+ReLU -> fc2+BN+ReLU -> fc3, batched over the whole B (M=B matmuls).
    BN scales are folded into w4/w5 columns; only per-channel shifts remain."""
    v = v_ref[...].astype(jnp.bfloat16)                         # (B, 1024)
    h = jnp.dot(v, w4_ref[...], preferred_element_type=jnp.float32)
    h = jnp.maximum(h + t4_ref[...], 0.0)
    h = jnp.dot(h.astype(jnp.bfloat16), w5_ref[...],
                preferred_element_type=jnp.float32)
    h = jnp.maximum(h + t5_ref[...], 0.0)
    # fc3 kept in f32 (tiny); bias already carries the flattened 3x3 identity,
    # and the weight/bias are zero-padded to 128 lanes for a lane-dense store.
    o_ref[...] = jnp.dot(h, w6_ref[...],
                         preferred_element_type=jnp.float32) + b6_ref[...]


# --------------------------------------------------------------------------- #
# Generation-aware planning
# --------------------------------------------------------------------------- #
def _tpu_caps():
    """Best-effort generation query: (TensorCores per device, VMEM capacity)."""
    vmem_cap = 128 * 1024 * 1024
    num_tc = 1
    try:
        kind = jax.devices()[0].device_kind.lower()
    except Exception:
        kind = ""
    if any(t in kind for t in ("v7", "7x", "v4", "v5p")):
        num_tc = 2                       # two TensorCores share the device grid
    if any(t in kind for t in ("v7", "7x")):
        vmem_cap = 64 * 1024 * 1024      # v7x: 64 MiB VMEM per TensorCore
    try:
        info = pltpu.get_tpu_info()
        v = getattr(info, "vmem_capacity_bytes", None)
        if v:
            vmem_cap = int(v)
    except Exception:
        pass
    return num_tc, vmem_cap


def _pick_tb(batch, n_points, c3_tile, num_tc, vmem_limit):
    """Batch elements per grid step.

    Single-TC chips (v5e/v6e): as large as VMEM allows — the ~0.35us per-step
    pipeline overhead is comparable to the per-step MXU work here, so fewer
    steps wins.  Two-TC chips (v7x): additionally keep the step count a
    multiple of the core count so both cores stay busy under
    dimension_semantics=("parallel",).
    """
    if batch <= 1:
        return 1
    # Dominant per-step live bytes per (batch, point) row: layer-3 f32 tile,
    # layer-2 f32+bf16, layer-1 f32 (+ transposed copy) + bf16, padded x.
    per_row = 4 * c3_tile + 6 * 128 + 10 * 64 + 96
    cap = max(1, min(32, (vmem_limit // 2) // max(1, n_points * per_row)))
    divisors = [d for d in range(1, batch + 1) if batch % d == 0 and d <= cap]
    if num_tc > 1:
        balanced = [d for d in divisors if (batch // d) % num_tc == 0]
        if balanced:
            return max(balanced)
    return max(divisors)


def _plan(batch, n_points):
    num_tc, vmem_cap = _tpu_caps()
    # Scoped-VMEM request: generous on 128 MiB chips, conservative on v7x.
    vmem_limit = int(min(vmem_cap // 2, 64 * 1024 * 1024))
    # Channel tile of the layer-3 matmul/pool loop: 256 when VMEM allows,
    # 128 on 64 MiB (v7x) chips at realistic point counts.
    c3_tile = 256 if (vmem_cap >= 96 * 1024 * 1024 or n_points <= 512) else 128
    tb = _pick_tb(batch, n_points, c3_tile, num_tc, vmem_limit)
    return tb, c3_tile, vmem_limit


# --------------------------------------------------------------------------- #
# Wrappers
# --------------------------------------------------------------------------- #
def _const_spec(a):
    # Full-array block with a constant index map -> stays resident in VMEM
    # across all grid steps (no re-DMA per step).
    # NOTE: on v7x these could additionally be single-buffered
    # (pipeline_mode=pl.Buffered(1)); left at the default for portability.
    return pl.BlockSpec(a.shape, lambda i, r=a.ndim: (0,) * r)


def _run_trunk(x_bcn, trans, layers, *, tb, c3_tile, vmem_limit, relu_last):
    B, Cin, N = x_bcn.shape
    assert B % tb == 0 and N % 8 == 0
    nsteps = B // tb
    apply_transform = trans is not None

    args = [x_bcn]
    in_specs = [pl.BlockSpec((tb, Cin, N), lambda i: (i, 0, 0))]   # channels-first, lane-dense in N
    if apply_transform:
        args.append(trans)
        in_specs.append(pl.BlockSpec((tb, Cin, Cin), lambda i: (i, 0, 0)))
    l1, l2, l3 = layers
    for p in (l1["w"], l1["shift"], l2["wT"], l2["shift"], l3["wT"], l3["shift"]):
        args.append(p)
        in_specs.append(_const_spec(p))

    c_out = l3["wT"].shape[1]
    kernel = functools.partial(_trunk_kernel, apply_transform=apply_transform,
                               relu_last=relu_last, c3_tile=c3_tile)
    out = pl.pallas_call(
        kernel,
        out_shape=jax.ShapeDtypeStruct((nsteps, tb, c_out), jnp.float32),
        grid=(nsteps,),
        in_specs=in_specs,
        out_specs=pl.BlockSpec((None, tb, c_out), lambda i: (i, 0, 0)),
        compiler_params=pltpu.CompilerParams(
            dimension_semantics=("parallel",),
            vmem_limit_bytes=vmem_limit),
    )(*args)
    return out.reshape(B, c_out)                                # (B, 1024)


def _run_stn_head(pooled, head, vmem_limit):
    B = pooled.shape[0]
    l4, l5 = head["fc1"], head["fc2"]
    args = [pooled,
            l4["wT"], l4["shift"],
            l5["wT"], l5["shift"],
            head["w6"], head["b6"]]
    out_pad = head["w6"].shape[1]
    out = pl.pallas_call(
        _stn_head_kernel,
        out_shape=jax.ShapeDtypeStruct((B, out_pad), jnp.float32),
        grid=(1,),
        in_specs=[_const_spec(a) for a in args],
        out_specs=pl.BlockSpec((B, out_pad), lambda i: (0, 0)),
        compiler_params=pltpu.CompilerParams(
            dimension_semantics=("arbitrary",),
            vmem_limit_bytes=vmem_limit),
    )(*args)
    return out[:, :9].reshape(B, 3, 3)


def prepare_params(raw):
    """Fold BatchNorm running stats + conv/fc biases once: the per-channel BN
    scale goes into the weights (rows for the channels-first VPU layer 1,
    columns of W.T for the MXU layers) and only a per-channel shift remains;
    MXU operands are bf16-cast here, outside the forward."""
    def bn_scale_shift(layer):
        scale = layer["gamma"] / jnp.sqrt(layer["var"] + EPS)
        shift = scale * (layer["b"] - layer["mean"]) + layer["beta"]
        return scale, shift

    def fold_cf(layer):      # layer 1: channels-first, evaluated on the VPU in f32
        scale, shift = bn_scale_shift(layer)
        return {"w": (layer["W"] * scale[:, None]).astype(jnp.float32),       # (Cout, Cin)
                "shift": shift[:, None].astype(jnp.float32)}                   # (Cout, 1)

    def fold_mm(layer):      # layers 2/3 + fc1/fc2: bf16 MXU matmul, scale in the columns
        scale, shift = bn_scale_shift(layer)
        return {"wT": (layer["W"].T * scale[None, :]).astype(jnp.bfloat16),    # (Cin, Cout)
                "shift": shift[None, :].astype(jnp.float32)}                   # (1, Cout)

    def trunk(p):
        return [fold_cf(p["l1"]), fold_mm(p["l2"]), fold_mm(p["l3"])]

    stn, enc = raw["stn"], raw["enc"]

    out_pad = 128                      # lane-dense head output; wrapper slices [:, :9]
    w6p = np.zeros((stn["l6"]["W"].shape[1], out_pad), np.float32)
    w6p[:, :9] = np.asarray(stn["l6"]["W"]).T
    b6p = np.zeros((1, out_pad), np.float32)
    b6p[0, :9] = np.asarray(stn["l6"]["b"])
    b6p[0, [0, 4, 8]] += 1.0           # fold the flattened 3x3 identity into fc3's bias

    return {
        "stn_trunk": trunk(stn),
        "stn_head": {"fc1": fold_mm(stn["l4"]),
                     "fc2": fold_mm(stn["l5"]),
                     "w6": jnp.asarray(w6p), "b6": jnp.asarray(b6p)},
        "enc_trunk": trunk(enc),
    }


def pointnet_encoder_forward(x_bcn, prep):
    """PointNetEncoder.forward (global_feat=True, feature_transform=False).

    Returns (global_feature (B,1024), trans (B,3,3), trans_feat=None).
    x is consumed channels-first (B, C, N) — no wrapper transpose.
    """
    B, C, N = x_bcn.shape
    x = x_bcn.astype(jnp.float32)
    tb, c3_tile, vmem_limit = _plan(B, N)

    # STN3d: point-wise trunk + per-batch max-pool, then the fc head batched
    # over the whole B (pulled out of the per-batch grid loop).
    pooled = _run_trunk(x, None, prep["stn_trunk"], tb=tb, c3_tile=c3_tile,
                        vmem_limit=vmem_limit, relu_last=True)              # (B, 1024)
    trans = _run_stn_head(pooled, prep["stn_head"], vmem_limit)             # (B, 3, 3)

    # Encoder trunk: the per-batch 3x3 input transform (torch.bmm) is folded
    # into the layer-1 weights; bn3 has no ReLU before the max (as in PyTorch).
    gfeat = _run_trunk(x, trans, prep["enc_trunk"], tb=tb, c3_tile=c3_tile,
                       vmem_limit=vmem_limit, relu_last=False)              # (B, 1024)
    return gfeat, trans, None


# --------------------------------------------------------------------------- #
# Pure-JAX reference (mirrors the PyTorch forward, inference-mode BN)
# --------------------------------------------------------------------------- #
def ref_forward(x_bcn, raw):
    hp = jax.lax.Precision.HIGHEST

    def conv_bn(y, p, relu=True):                       # y: (B, C, N)
        y = jnp.einsum("oc,bcn->bon", p["W"], y, precision=hp) + p["b"][None, :, None]
        y = (p["gamma"][None, :, None] * (y - p["mean"][None, :, None])
             / jnp.sqrt(p["var"][None, :, None] + EPS) + p["beta"][None, :, None])
        return jax.nn.relu(y) if relu else y

    def fc_bn(y, p):                                    # y: (B, C)
        y = jnp.dot(y, p["W"].T, precision=hp) + p["b"][None, :]
        y = p["gamma"] * (y - p["mean"]) / jnp.sqrt(p["var"] + EPS) + p["beta"]
        return jax.nn.relu(y)

    stn, enc = raw["stn"], raw["enc"]
    # --- STN3d ---
    h = x_bcn
    for name in ("l1", "l2", "l3"):
        h = conv_bn(h, stn[name])
    h = jnp.max(h, axis=2)                              # (B, 1024)
    h = fc_bn(h, stn["l4"])
    h = fc_bn(h, stn["l5"])
    h = jnp.dot(h, stn["l6"]["W"].T, precision=hp) + stn["l6"]["b"][None, :]
    iden = jnp.array([1, 0, 0, 0, 1, 0, 0, 0, 1], jnp.float32)[None, :]
    trans = (h + iden).reshape(-1, 3, 3)
    # --- encoder ---
    x = jnp.transpose(x_bcn, (0, 2, 1))                 # (B, N, 3)
    x = jnp.einsum("bnc,bcd->bnd", x, trans, precision=hp)
    x = jnp.transpose(x, (0, 2, 1))                     # (B, 3, N)
    x = conv_bn(x, enc["l1"])
    x = conv_bn(x, enc["l2"])
    x = conv_bn(x, enc["l3"], relu=False)
    gfeat = jnp.max(x, axis=2)                          # (B, 1024)
    return gfeat, trans, None


# --------------------------------------------------------------------------- #
# Deterministic parameter init
# --------------------------------------------------------------------------- #
def init_bn_layer(key, out_c, in_c):
    k = jax.random.split(key, 6)
    return {
        "W": jax.random.normal(k[0], (out_c, in_c), jnp.float32) / np.sqrt(in_c),
        "b": 0.1 * jax.random.normal(k[1], (out_c,), jnp.float32),
        "gamma": 1.0 + 0.1 * jax.random.normal(k[2], (out_c,), jnp.float32),
        "beta": 0.1 * jax.random.normal(k[3], (out_c,), jnp.float32),
        "mean": 0.1 * jax.random.normal(k[4], (out_c,), jnp.float32),
        "var": jax.random.uniform(k[5], (out_c,), jnp.float32, 0.5, 1.5),
    }


if __name__ == "__main__":
    key = jax.random.PRNGKey(0)
    B, C, N = 2, 3, 128          # batch=2, xyz channels=3, 128 points
    ks = jax.random.split(key, 11)

    raw = {
        "stn": {
            "l1": init_bn_layer(ks[0], 64, C),
            "l2": init_bn_layer(ks[1], 128, 64),
            "l3": init_bn_layer(ks[2], 1024, 128),
            "l4": init_bn_layer(ks[3], 512, 1024),
            "l5": init_bn_layer(ks[4], 256, 512),
            "l6": {"W": jax.random.normal(ks[5], (9, 256), jnp.float32) / np.sqrt(256),
                   "b": 0.1 * jax.random.normal(ks[6], (9,), jnp.float32)},
        },
        "enc": {
            "l1": init_bn_layer(ks[7], 64, C),
            "l2": init_bn_layer(ks[8], 128, 64),
            "l3": init_bn_layer(ks[9], 1024, 128),
        },
    }
    x = jax.random.normal(ks[10], (B, C, N), jnp.float32)

    prep = prepare_params(raw)          # fold BN scales into weights / bf16-cast once

    gfeat, trans, trans_feat = pointnet_encoder_forward(x, prep)
    gfeat = jax.block_until_ready(gfeat)
    trans = jax.block_until_ready(trans)

    ref_g, ref_t, _ = ref_forward(x, raw)

    assert gfeat.shape == (B, 1024) and trans.shape == (B, 3, 3) and trans_feat is None
    # Kernel uses bf16 MXU operands (with BN scales folded into the bf16
    # weights) vs an f32 HIGHEST-precision reference; tolerances sized
    # accordingly.
    np.testing.assert_allclose(np.asarray(trans), np.asarray(ref_t),
                               rtol=5e-2, atol=5e-2)
    np.testing.assert_allclose(np.asarray(gfeat), np.asarray(ref_g),
                               rtol=5e-2, atol=1e-1)
    print("KERNEL_OK")
</pallas_src>

<mosaic_0001>
module attributes {stable_mosaic.version = 11 : i64} {
  func.func @_trunk_kernel(%arg0: i32, %arg1: memref<2x3x128xf32, #tpu.memory_space<vmem>>, %arg2: memref<64x3xf32, #tpu.memory_space<vmem>>, %arg3: memref<64x1xf32, #tpu.memory_space<vmem>>, %arg4: memref<64x128xbf16, #tpu.memory_space<vmem>>, %arg5: memref<1x128xf32, #tpu.memory_space<vmem>>, %arg6: memref<128x1024xbf16, #tpu.memory_space<vmem>>, %arg7: memref<1x1024xf32, #tpu.memory_space<vmem>>, %arg8: memref<1x2x1024xf32, #tpu.memory_space<vmem>>) attributes {dimension_semantics = [#tpu.dimension_semantics<parallel>], iteration_bounds = array<i64: 1>, scalar_prefetch = 0 : i64, scratch_operands = 0 : i64, tpu.core_type = #tpu.core_type<tc>, window_params = [{transform_indices = @transform_0, window_bounds = array<i64: 2, 3, 128>}, {pipeline_mode = #tpu.pipeline_mode<synchronous>, transform_indices = @transform_1, window_bounds = array<i64: 64, 3>}, {pipeline_mode = #tpu.pipeline_mode<synchronous>, transform_indices = @transform_2, window_bounds = array<i64: 64, 1>}, {pipeline_mode = #tpu.pipeline_mode<synchronous>, transform_indices = @transform_3, window_bounds = array<i64: 64, 128>}, {pipeline_mode = #tpu.pipeline_mode<synchronous>, transform_indices = @transform_4, window_bounds = array<i64: 1, 128>}, {pipeline_mode = #tpu.pipeline_mode<synchronous>, transform_indices = @transform_5, window_bounds = array<i64: 128, 1024>}, {pipeline_mode = #tpu.pipeline_mode<synchronous>, transform_indices = @transform_6, window_bounds = array<i64: 1, 1024>}, {transform_indices = @transform_7, window_bounds = array<i64: 1, 2, 1024>}]} {
    %c0 = arith.constant 0 : index
    %c0_0 = arith.constant 0 : index
    %c0_1 = arith.constant 0 : index
    %0 = vector.load %arg1[%c0, %c0_0, %c0_1] : memref<2x3x128xf32, #tpu.memory_space<vmem>>, vector<2x3x128xf32>
    %c0_2 = arith.constant 0 : index
    %c0_3 = arith.constant 0 : index
    %1 = vector.load %arg2[%c0_2, %c0_3] : memref<64x3xf32, #tpu.memory_space<vmem>>, vector<64x3xf32>
    %2 = vector.extract_strided_slice %1 {offsets = [0, 0], sizes = [64, 1], strides = [1, 1]} : vector<64x3xf32> to vector<64x1xf32>
    %3 = vector.shape_cast %2 : vector<64x1xf32> to vector<1x64x1xf32>
    %4 = vector.extract_strided_slice %1 {offsets = [0, 1], sizes = [64, 1], strides = [1, 1]} : vector<64x3xf32> to vector<64x1xf32>
    %5 = vector.shape_cast %4 : vector<64x1xf32> to vector<1x64x1xf32>
    %6 = vector.extract_strided_slice %1 {offsets = [0, 2], sizes = [64, 1], strides = [1, 1]} : vector<64x3xf32> to vector<64x1xf32>
    %7 = vector.shape_cast %6 : vector<64x1xf32> to vector<1x64x1xf32>
    %8 = vector.extract_strided_slice %0 {offsets = [0, 0, 0], sizes = [2, 1, 128], strides = [1, 1, 1]} : vector<2x3x128xf32> to vector<2x1x128xf32>
    %9 = vector.broadcast %3 : vector<1x64x1xf32> to vector<2x64x128xf32>
    %10 = vector.broadcast %8 : vector<2x1x128xf32> to vector<2x64x128xf32>
    %11 = arith.mulf %9, %10 : vector<2x64x128xf32>
    %12 = vector.extract_strided_slice %0 {offsets = [0, 1, 0], sizes = [2, 1, 128], strides = [1, 1, 1]} : vector<2x3x128xf32> to vector<2x1x128xf32>
    %13 = vector.broadcast %5 : vector<1x64x1xf32> to vector<2x64x128xf32>
    %14 = vector.broadcast %12 : vector<2x1x128xf32> to vector<2x64x128xf32>
    %15 = arith.mulf %13, %14 : vector<2x64x128xf32>
    %16 = arith.addf %11, %15 : vector<2x64x128xf32>
    %17 = vector.extract_strided_slice %0 {offsets = [0, 2, 0], sizes = [2, 1, 128], strides = [1, 1, 1]} : vector<2x3x128xf32> to vector<2x1x128xf32>
    %18 = vector.broadcast %7 : vector<1x64x1xf32> to vector<2x64x128xf32>
    %19 = vector.broadcast %17 : vector<2x1x128xf32> to vector<2x64x128xf32>
    %20 = arith.mulf %18, %19 : vector<2x64x128xf32>
    %21 = arith.addf %16, %20 : vector<2x64x128xf32>
    %c0_4 = arith.constant 0 : index
    %c0_5 = arith.constant 0 : index
    %22 = vector.load %arg3[%c0_4, %c0_5] : memref<64x1xf32, #tpu.memory_space<vmem>>, vector<64x1xf32>
    %23 = vector.shape_cast %22 : vector<64x1xf32> to vector<1x64x1xf32>
    %24 = vector.broadcast %23 : vector<1x64x1xf32> to vector<2x64x128xf32>
    %25 = arith.addf %21, %24 : vector<2x64x128xf32>
    %cst = arith.constant 0.000000e+00 : f32
    %26 = vector.broadcast %cst : f32 to vector<2x64x128xf32>
    %27 = arith.maximumf %25, %26 : vector<2x64x128xf32>
    %28 = tpu.transpose %27, [0, 2, 1] : vector<2x64x128xf32> -> vector<2x128x64xf32>
    %29 = vector.shape_cast %28 : vector<2x128x64xf32> to vector<256x64xf32>
    %30 = arith.truncf %29 : vector<256x64xf32> to vector<256x64xbf16>
    %c0_6 = arith.constant 0 : index
    %c0_7 = arith.constant 0 : index
    %31 = vector.load %arg4[%c0_6, %c0_7] : memref<64x128xbf16, #tpu.memory_space<vmem>>, vector<64x128xbf16>
    %cst_8 = arith.constant dense<0.000000e+00> : vector<256x128xf32>
    %32 = tpu.matmul %30, %31, %cst_8 {dimension_numbers = #tpu.dot_dimension_numbers<[1], [0], [0], [1], [0, 0, 1, 1], [], []>} : vector<256x64xbf16>, vector<64x128xbf16>, vector<256x128xf32> -> vector<256x128xf32>
    %c0_9 = arith.constant 0 : index
    %c0_10 = arith.constant 0 : index
    %33 = vector.load %arg5[%c0_9, %c0_10] : memref<1x128xf32, #tpu.memory_space<vmem>>, vector<1x128xf32>
    %34 = vector.broadcast %33 : vector<1x128xf32> to vector<256x128xf32>
    %35 = arith.addf %32, %34 : vector<256x128xf32>
    %cst_11 = arith.constant 0.000000e+00 : f32
    %36 = vector.broadcast %cst_11 : f32 to vector<256x128xf32>
    %37 = arith.maximumf %35, %36 : vector<256x128xf32>
    %38 = arith.truncf %37 : vector<256x128xf32> to vector<256x128xbf16>
    %c0_12 = arith.constant 0 : index
    %c0_13 = arith.constant 0 : index
    %39 = vector.load %arg6[%c0_12, %c0_13] : memref<128x1024xbf16, #tpu.memory_space<vmem>>, vector<128x256xbf16>
    %cst_14 = arith.constant dense<0.000000e+00> : vector<256x256xf32>
    %40 = tpu.matmul %38, %39, %cst_14 {dimension_numbers = #tpu.dot_dimension_numbers<[1], [0], [0], [1], [0, 0, 1, 1], [], []>} : vector<256x128xbf16>, vector<128x256xbf16>, vector<256x256xf32> -> vector<256x256xf32>
    %41 = vector.shape_cast %40 : vector<256x256xf32> to vector<2x128x256xf32>
    %cst_15 = arith.constant dense<0xFF800000> : vector<2x256xf32>
    %42 = vector.multi_reduction <maximumf>, %41, %cst_15 [1] : vector<2x128x256xf32> to vector<2x256xf32>
    %c0_16 = arith.constant 0 : index
    %c0_17 = arith.constant 0 : index
    %43 = vector.load %arg7[%c0_16, %c0_17] : memref<1x1024xf32, #tpu.memory_space<vmem>>, vector<1x256xf32>
    %44 = vector.broadcast %43 : vector<1x256xf32> to vector<2x256xf32>
    %45 = arith.addf %42, %44 : vector<2x256xf32>
    %cst_18 = arith.constant 0.000000e+00 : f32
    %46 = vector.broadcast %cst_18 : f32 to vector<2x256xf32>
    %47 = arith.maximumf %45, %46 : vector<2x256xf32>
    %c0_19 = arith.constant 0 : index
    %c0_20 = arith.constant 0 : index
    %c0_21 = arith.constant 0 : index
    %48 = vector.load %arg8[%c0_19, %c0_20, %c0_21] : memref<1x2x1024xf32, #tpu.memory_space<vmem>>, vector<1x2x256xf32>
    %49 = vector.shape_cast %48 : vector<1x2x256xf32> to vector<2x256xf32>
    %50 = vector.shape_cast %47 : vector<2x256xf32> to vector<1x2x256xf32>
    tpu.vector_store %arg8[%c0_19, %c0_20, %c0_21], %50 {strides = array<i32>} : memref<1x2x1024xf32, #tpu.memory_space<vmem>>, vector<1x2x256xf32>,
    %c0_22 = arith.constant 0 : index
    %c256 = arith.constant 256 : index
    %51 = vector.load %arg6[%c0_22, %c256] : memref<128x1024xbf16, #tpu.memory_space<vmem>>, vector<128x256xbf16>
    %cst_23 = arith.constant dense<0.000000e+00> : vector<256x256xf32>
    %52 = tpu.matmul %38, %51, %cst_23 {dimension_numbers = #tpu.dot_dimension_numbers<[1], [0], [0], [1], [0, 0, 1, 1], [], []>} : vector<256x128xbf16>, vector<128x256xbf16>, vector<256x256xf32> -> vector<256x256xf32>
    %53 = vector.shape_cast %52 : vector<256x256xf32> to vector<2x128x256xf32>
    %cst_24 = arith.constant dense<0xFF800000> : vector<2x256xf32>
    %54 = vector.multi_reduction <maximumf>, %53, %cst_24 [1] : vector<2x128x256xf32> to vector<2x256xf32>
    %c0_25 = arith.constant 0 : index
    %c256_26 = arith.constant 256 : index
    %55 = vector.load %arg7[%c0_25, %c256_26] : memref<1x1024xf32, #tpu.memory_space<vmem>>, vector<1x256xf32>
    %56 = vector.broadcast %55 : vector<1x256xf32> to vector<2x256xf32>
    %57 = arith.addf %54, %56 : vector<2x256xf32>
    %cst_27 = arith.constant 0.000000e+00 : f32
    %58 = vector.broadcast %cst_27 : f32 to vector<2x256xf32>
    %59 = arith.maximumf %57, %58 : vector<2x256xf32>
    %c0_28 = arith.constant 0 : index
    %c0_29 = arith.constant 0 : index
    %c256_30 = arith.constant 256 : index
    %60 = vector.load %arg8[%c0_28, %c0_29, %c256_30] : memref<1x2x1024xf32, #tpu.memory_space<vmem>>, vector<1x2x256xf32>
    %61 = vector.shape_cast %60 : vector<1x2x256xf32> to vector<2x256xf32>
    %62 = vector.shape_cast %59 : vector<2x256xf32> to vector<1x2x256xf32>
    tpu.vector_store %arg8[%c0_28, %c0_29, %c256_30], %62 {strides = array<i32>} : memref<1x2x1024xf32, #tpu.memory_space<vmem>>, vector<1x2x256xf32>,
    %c0_31 = arith.constant 0 : index
    %c512 = arith.constant 512 : index
    %63 = vector.load %arg6[%c0_31, %c512] : memref<128x1024xbf16, #tpu.memory_space<vmem>>, vector<128x256xbf16>
    %cst_32 = arith.constant dense<0.000000e+00> : vector<256x256xf32>
    %64 = tpu.matmul %38, %63, %cst_32 {dimension_numbers = #tpu.dot_dimension_numbers<[1], [0], [0], [1], [0, 0, 1, 1], [], []>} : vector<256x128xbf16>, vector<128x256xbf16>, vector<256x256xf32> -> vector<256x256xf32>
    %65 = vector.shape_cast %64 : vector<256x256xf32> to vector<2x128x256xf32>
    %cst_33 = arith.constant dense<0xFF800000> : vector<2x256xf32>
    %66 = vector.multi_reduction <maximumf>, %65, %cst_33 [1] : vector<2x128x256xf32> to vector<2x256xf32>
    %c0_34 = arith.constant 0 : index
    %c512_35 = arith.constant 512 : index
    %67 = vector.load %arg7[%c0_34, %c512_35] : memref<1x1024xf32, #tpu.memory_space<vmem>>, vector<1x256xf32>
    %68 = vector.broadcast %67 : vector<1x256xf32> to vector<2x256xf32>
    %69 = arith.addf %66, %68 : vector<2x256xf32>
    %cst_36 = arith.constant 0.000000e+00 : f32
    %70 = vector.broadcast %cst_36 : f32 to vector<2x256xf32>
    %71 = arith.maximumf %69, %70 : vector<2x256xf32>
    %c0_37 = arith.constant 0 : index
    %c0_38 = arith.constant 0 : index
    %c512_39 = arith.constant 512 : index
    %72 = vector.load %arg8[%c0_37, %c0_38, %c512_39] : memref<1x2x1024xf32, #tpu.memory_space<vmem>>, vector<1x2x256xf32>
    %73 = vector.shape_cast %72 : vector<1x2x256xf32> to vector<2x256xf32>
    %74 = vector.shape_cast %71 : vector<2x256xf32> to vector<1x2x256xf32>
    tpu.vector_store %arg8[%c0_37, %c0_38, %c512_39], %74 {strides = array<i32>} : memref<1x2x1024xf32, #tpu.memory_space<vmem>>, vector<1x2x256xf32>,
    %c0_40 = arith.constant 0 : index
    %c768 = arith.constant 768 : index
    %75 = vector.load %arg6[%c0_40, %c768] : memref<128x1024xbf16, #tpu.memory_space<vmem>>, vector<128x256xbf16>
    %cst_41 = arith.constant dense<0.000000e+00> : vector<256x256xf32>
    %76 = tpu.matmul %38, %75, %cst_41 {dimension_numbers = #tpu.dot_dimension_numbers<[1], [0], [0], [1], [0, 0, 1, 1], [], []>} : vector<256x128xbf16>, vector<128x256xbf16>, vector<256x256xf32> -> vector<256x256xf32>
    %77 = vector.shape_cast %76 : vector<256x256xf32> to vector<2x128x256xf32>
    %cst_42 = arith.constant dense<0xFF800000> : vector<2x256xf32>
    %78 = vector.multi_reduction <maximumf>, %77, %cst_42 [1] : vector<2x128x256xf32> to vector<2x256xf32>
    %c0_43 = arith.constant 0 : index
    %c768_44 = arith.constant 768 : index
    %79 = vector.load %arg7[%c0_43, %c768_44] : memref<1x1024xf32, #tpu.memory_space<vmem>>, vector<1x256xf32>
    %80 = vector.broadcast %79 : vector<1x256xf32> to vector<2x256xf32>
    %81 = arith.addf %78, %80 : vector<2x256xf32>
    %cst_45 = arith.constant 0.000000e+00 : f32
    %82 = vector.broadcast %cst_45 : f32 to vector<2x256xf32>
    %83 = arith.maximumf %81, %82 : vector<2x256xf32>
    %c0_46 = arith.constant 0 : index
    %c0_47 = arith.constant 0 : index
    %c768_48 = arith.constant 768 : index
    %84 = vector.load %arg8[%c0_46, %c0_47, %c768_48] : memref<1x2x1024xf32, #tpu.memory_space<vmem>>, vector<1x2x256xf32>
    %85 = vector.shape_cast %84 : vector<1x2x256xf32> to vector<2x256xf32>
    %86 = vector.shape_cast %83 : vector<2x256xf32> to vector<1x2x256xf32>
    tpu.vector_store %arg8[%c0_46, %c0_47, %c768_48], %86 {strides = array<i32>} : memref<1x2x1024xf32, #tpu.memory_space<vmem>>, vector<1x2x256xf32>,
    return
  }
  func.func @transform_0(%arg0: i32) -> (i32, i32, i32) {
    %c0_i32 = arith.constant 0 : i32
    %c0_i32_0 = arith.constant 0 : i32
    %c0_i32_1 = arith.constant 0 : i32
    return %arg0, %c0_i32, %c0_i32_0 : i32, i32, i32
  }
  func.func @transform_1(%arg0: i32) -> (i32, i32) {
    %c0_i32 = arith.constant 0 : i32
    %c0_i32_0 = arith.constant 0 : i32
    %c0_i32_1 = arith.constant 0 : i32
    return %c0_i32, %c0_i32_0 : i32, i32
  }
  func.func @transform_2(%arg0: i32) -> (i32, i32) {
    %c0_i32 = arith.constant 0 : i32
    %c0_i32_0 = arith.constant 0 : i32
    %c0_i32_1 = arith.constant 0 : i32
    return %c0_i32, %c0_i32_0 : i32, i32
  }
  func.func @transform_3(%arg0: i32) -> (i32, i32) {
    %c0_i32 = arith.constant 0 : i32
    %c0_i32_0 = arith.constant 0 : i32
    %c0_i32_1 = arith.constant 0 : i32
    return %c0_i32, %c0_i32_0 : i32, i32
  }
  func.func @transform_4(%arg0: i32) -> (i32, i32) {
    %c0_i32 = arith.constant 0 : i32
    %c0_i32_0 = arith.constant 0 : i32
    %c0_i32_1 = arith.constant 0 : i32
    return %c0_i32, %c0_i32_0 : i32, i32
  }
  func.func @transform_5(%arg0: i32) -> (i32, i32) {
    %c0_i32 = arith.constant 0 : i32
    %c0_i32_0 = arith.constant 0 : i32
    %c0_i32_1 = arith.constant 0 : i32
    return %c0_i32, %c0_i32_0 : i32, i32
  }
  func.func @transform_6(%arg0: i32) -> (i32, i32) {
    %c0_i32 = arith.constant 0 : i32
    %c0_i32_0 = arith.constant 0 : i32
    %c0_i32_1 = arith.constant 0 : i32
    return %c0_i32, %c0_i32_0 : i32, i32
  }
  func.func @transform_7(%arg0: i32) -> (i32, i32, i32) {
    %c0_i32 = arith.constant 0 : i32
    %c0_i32_0 = arith.constant 0 : i32
    %c0_i32_1 = arith.constant 0 : i32
    return %arg0, %c0_i32, %c0_i32_0 : i32, i32, i32
  }
}

</mosaic_0001>

<llo_original>
// kernel: tpu_custom_call.1
$region0: #{tpu_custom_call.1}
  #allocation0 [shape = 'u32[]', space=smem, size = 0x4, offset = 0x4, fixed_abs, tag = 'smem constant byte address 0x4 - core index']
  #allocation1 [shape = 'u32[72,128]{1,0:T(1,128)}', space=vmem, size = 0x9000, scoped, tag = 'internal scratch']
  %s0 = inlined_call_operand.vmem [shape: f32[2,3,128], index: 0, kind: input, shape index: {}]
  %s1 = inlined_call_operand.vmem [shape: f32[64,3], index: 1, kind: input, shape index: {}]
  %s2 = inlined_call_operand.vmem [shape: f32[64,1], index: 2, kind: input, shape index: {}]
  %s3 = inlined_call_operand.vmem [shape: bf16[64,128], index: 3, kind: input, shape index: {}]
  %s4 = inlined_call_operand.vmem [shape: f32[1,128], index: 4, kind: input, shape index: {}]
  %s5 = inlined_call_operand.hbm [shape: bf16[128,1024], index: 5, kind: input, shape index: {}]
  %s6 = inlined_call_operand.vmem [shape: f32[1,1024], index: 6, kind: input, shape index: {}]
  %s7 = inlined_call_operand.hbm [shape: f32[1,2,1024], index: 7, kind: output, shape index: {}]
  %s8 = sld [smem:[#allocation0]]
  $region42: #{tpu_custom_call.1} parent=0
    _
  %s10 = ssub.s32 1, %s8
  %s11 = scalar_select 0, %s10, %s8
  $region1: #{tpu_custom_call.1} parent=0
    #allocation2 [shape = 'u8[262144]{0}', space=vmem, size = 0x40000, scoped, tag = 'input window, operand 5, single buffered']
    #allocation3 [shape = 's32[1]{0}', space=sflag, size = 0x4, scoped, tag = 'scoped memory for tpu_custom_call.1']
    #allocation4 [shape = 's32[1]{0}', space=sflag, size = 0x4, scoped, tag = 'scoped memory for tpu_custom_call.1']
    #allocation5 [shape = 'u8[8192]{0}', space=vmem, size = 0x2000, scoped, tag = 'output window, operand 0, single buffered']
    %12 = vsyncpa [#allocation3], 0
    %13 = vsyncpa [#allocation4], 0
    // Predicated region
    $region2: #{tpu_custom_call.1} parent=1 // pred_check
      _
    $region3: #{tpu_custom_call.1} parent=1 // pred_check_branch
      %15 = sbr.rel (0) target = $region5
    $region4: #{tpu_custom_call.1} parent=1 // pred_region
      _
    $region5: #{tpu_custom_call.1} parent=1 // pred_fallthru
      _
    // Predicated region
    $region6: #{tpu_custom_call.1} parent=1 // pred_check
      _
    $region7: #{tpu_custom_call.1} parent=1 // pred_check_branch
      %17 = sbr.rel (0) target = $region9
    $region8: #{tpu_custom_call.1} parent=1 // pred_region
      _
    $region9: #{tpu_custom_call.1} parent=1 // pred_fallthru
      _
    // Predicated region
    $region10: #{tpu_custom_call.1} parent=1 // pred_check
      _
    $region11: #{tpu_custom_call.1} parent=1 // pred_check_branch
      %19 = sbr.rel (0) target = $region13
    $region12: #{tpu_custom_call.1} parent=1 // pred_region
      _
    $region13: #{tpu_custom_call.1} parent=1 // pred_fallthru
      _
    // Predicated region
    $region14: #{tpu_custom_call.1} parent=1 // pred_check
      _
    $region15: #{tpu_custom_call.1} parent=1 // pred_check_branch
      %21 = sbr.rel (0) target = $region17
    $region16: #{tpu_custom_call.1} parent=1 // pred_region
      _
    $region17: #{tpu_custom_call.1} parent=1 // pred_fallthru
      _
    // Predicated region
    $region18: #{tpu_custom_call.1} parent=1 // pred_check
      _
    $region19: #{tpu_custom_call.1} parent=1 // pred_check_branch
      %23 = sbr.rel (0) target = $region21
    $region20: #{tpu_custom_call.1} parent=1 // pred_region
      _
    $region21: #{tpu_custom_call.1} parent=1 // pred_fallthru
      _
    // Predicated region
    $region22: #{tpu_custom_call.1} parent=1 // pred_check
      _
    $region23: #{tpu_custom_call.1} parent=1 // pred_check_branch
      %25 = sbr.rel (0) target = $region25
    $region24: #{tpu_custom_call.1} parent=1 // pred_region
      %27 = vsyncadd [#allocation3], 0
      %s28 = sshll.u32 %s5, 4
      %s29 = int_to_ptr.hbm [resolvable:$true] %s28
      %s30 = sshll.u32 [#allocation2], 4
      %s31 = int_to_ptr.vmem [resolvable:$true] %s30
      %36 = dma.hbm_to_vmem [thread:$0]  %s29, 8192, %s31, [#allocation3], 512, 512, 32
    $region25: #{tpu_custom_call.1} parent=1 // pred_fallthru
      _
    // Predicated region
    $region26: #{tpu_custom_call.1} parent=1 // pred_check
      _
    $region27: #{tpu_custom_call.1} parent=1 // pred_check_branch
      %38 = sbr.rel (0) target = $region29
    $region28: #{tpu_custom_call.1} parent=1 // pred_region
      _
    $region29: #{tpu_custom_call.1} parent=1 // pred_fallthru
      _
    // Predicated region
    $region30: #{tpu_custom_call.1} parent=1 // pred_check
      _
    $region31: #{tpu_custom_call.1} parent=1 // pred_check_branch
      %40 = sbr.rel (0) target = $region33
    $region32: #{tpu_custom_call.1} parent=1 // pred_region
      %42 = dma.done [#allocation3], 8192
    $region33: #{tpu_custom_call.1} parent=1 // pred_fallthru
      _
    %v44 = vld [vmem:[%s0] sm:$0x7]
    %v45 = vld [vmem:[%s0 + $0x4] sm:$0x7]
    %v46 = vld [vmem:[%s1] sm:$0xff]
    %v47 = vld [vmem:[%s1 + $0x8] sm:$0xff]
    %v48 = vld [vmem:[%s1 + $0x10] sm:$0xff]
    %v49 = vld [vmem:[%s1 + $0x18] sm:$0xff]
    %v50 = vld [vmem:[%s1 + $0x20] sm:$0xff]
    %v51 = vld [vmem:[%s1 + $0x28] sm:$0xff]
    %v52 = vld [vmem:[%s1 + $0x30] sm:$0xff]
    %v53 = vld [vmem:[%s1 + $0x38] sm:$0xff]
    %55 = vset.pattern.permute.xlu0 0
    %56 = vperm.xlu0 %55, %v46
    %v57 = vpop.permute.xlu0 %56
    %60 = vset.pattern.permute.xlu0 0
    %61 = vperm.xlu0 %60, %v47
    %v62 = vpop.permute.xlu0 %61
    %65 = vset.pattern.permute.xlu0 0
    %66 = vperm.xlu0 %65, %v48
    %v67 = vpop.permute.xlu0 %66
    %70 = vset.pattern.permute.xlu0 0
    %71 = vperm.xlu0 %70, %v49
    %v72 = vpop.permute.xlu0 %71
    %75 = vset.pattern.permute.xlu0 0
    %76 = vperm.xlu0 %75, %v50
    %v77 = vpop.permute.xlu0 %76
    %80 = vset.pattern.permute.xlu0 0
    %81 = vperm.xlu0 %80, %v51
    %v82 = vpop.permute.xlu0 %81
    %85 = vset.pattern.permute.xlu0 0
    %86 = vperm.xlu0 %85, %v52
    %v87 = vpop.permute.xlu0 %86
    %90 = vset.pattern.permute.xlu0 0
    %91 = vperm.xlu0 %90, %v53
    %v92 = vpop.permute.xlu0 %91
    %v94 = vperm.slane %v44, 0
    %v95 = vperm.slane %v45, 0
    %v96 = vmul.f32 %v57, %v94
    %v97 = vmul.f32 %v62, %v94
    %v98 = vmul.f32 %v67, %v94
    %v99 = vmul.f32 %v72, %v94
    %v100 = vmul.f32 %v77, %v94
    %v101 = vmul.f32 %v82, %v94
    %v102 = vmul.f32 %v87, %v94
    %v103 = vmul.f32 %v92, %v94
    %v104 = vmul.f32 %v57, %v95
    %v105 = vmul.f32 %v62, %v95
    %v106 = vmul.f32 %v67, %v95
    %v107 = vmul.f32 %v72, %v95
    %v108 = vmul.f32 %v77, %v95
    %v109 = vmul.f32 %v82, %v95
    %v110 = vmul.f32 %v87, %v95
    %v111 = vmul.f32 %v92, %v95
    %112 = vset.pattern.permute.xlu0 1
    %113 = vperm.xlu0 %112, %v46
    %v114 = vpop.permute.xlu0 %113
    %116 = vset.pattern.permute.xlu0 1
    %117 = vperm.xlu0 %116, %v47
    %v118 = vpop.permute.xlu0 %117
    %120 = vset.pattern.permute.xlu0 1
    %121 = vperm.xlu0 %120, %v48
    %v122 = vpop.permute.xlu0 %121
    %124 = vset.pattern.permute.xlu0 1
    %125 = vperm.xlu0 %124, %v49
    %v126 = vpop.permute.xlu0 %125
    %128 = vset.pattern.permute.xlu0 1
    %129 = vperm.xlu0 %128, %v50
    %v130 = vpop.permute.xlu0 %129
    %132 = vset.pattern.permute.xlu0 1
    %133 = vperm.xlu0 %132, %v51
    %v134 = vpop.permute.xlu0 %133
    %136 = vset.pattern.permute.xlu0 1
    %137 = vperm.xlu0 %136, %v52
    %v138 = vpop.permute.xlu0 %137
    %140 = vset.pattern.permute.xlu0 1
    %141 = vperm.xlu0 %140, %v53
    %v142 = vpop.permute.xlu0 %141
    %v144 = vperm.slane %v44, 1
    %v145 = vperm.slane %v45, 1
    %v146 = vmul.f32 %v114, %v144
    %v147 = vmul.f32 %v118, %v144
    %v148 = vmul.f32 %v122, %v144
    %v149 = vmul.f32 %v126, %v144
    %v150 = vmul.f32 %v130, %v144
    %v151 = vmul.f32 %v134, %v144
    %v152 = vmul.f32 %v138, %v144
    %v153 = vmul.f32 %v142, %v144
    %v154 = vmul.f32 %v114, %v145
    %v155 = vmul.f32 %v118, %v145
    %v156 = vmul.f32 %v122, %v145
    %v157 = vmul.f32 %v126, %v145
    %v158 = vmul.f32 %v130, %v145
    %v159 = vmul.f32 %v134, %v145
    %v160 = vmul.f32 %v138, %v145
    %v161 = vmul.f32 %v142, %v145
    %v162 = vadd.f32 %v96, %v146
    %v163 = vadd.f32 %v97, %v147
    %v164 = vadd.f32 %v98, %v148
    %v165 = vadd.f32 %v99, %v149
    %v166 = vadd.f32 %v100, %v150
    %v167 = vadd.f32 %v101, %v151
    %v168 = vadd.f32 %v102, %v152
    %v169 = vadd.f32 %v103, %v153
    %v170 = vadd.f32 %v104, %v154
    %v171 = vadd.f32 %v105, %v155
    %v172 = vadd.f32 %v106, %v156
    %v173 = vadd.f32 %v107, %v157
    %v174 = vadd.f32 %v108, %v158
    %v175 = vadd.f32 %v109, %v159
    %v176 = vadd.f32 %v110, %v160
    %v177 = vadd.f32 %v111, %v161
    %178 = vset.pattern.permute.xlu0 2
    %179 = vperm.xlu0 %178, %v46
    %v180 = vpop.permute.xlu0 %179
    %182 = vset.pattern.permute.xlu0 2
    %183 = vperm.xlu0 %182, %v47
    %v184 = vpop.permute.xlu0 %183
    %186 = vset.pattern.permute.xlu0 2
    %187 = vperm.xlu0 %186, %v48
    %v188 = vpop.permute.xlu0 %187
    %190 = vset.pattern.permute.xlu0 2
    %191 = vperm.xlu0 %190, %v49
    %v192 = vpop.permute.xlu0 %191
    %194 = vset.pattern.permute.xlu0 2
    %195 = vperm.xlu0 %194, %v50
    %v196 = vpop.permute.xlu0 %195
    %198 = vset.pattern.permute.xlu0 2
    %199 = vperm.xlu0 %198, %v51
    %v200 = vpop.permute.xlu0 %199
    %202 = vset.pattern.permute.xlu0 2
    %203 = vperm.xlu0 %202, %v52
    %v204 = vpop.permute.xlu0 %203
    %206 = vset.pattern.permute.xlu0 2
    %207 = vperm.xlu0 %206, %v53
    %v208 = vpop.permute.xlu0 %207
    %v210 = vperm.slane %v44, 2
    %v211 = vperm.slane %v45, 2
    %v212 = vmul.f32 %v180, %v210
    %v213 = vmul.f32 %v184, %v210
    %v214 = vmul.f32 %v188, %v210
    %v215 = vmul.f32 %v192, %v210
    %v216 = vmul.f32 %v196, %v210
    %v217 = vmul.f32 %v200, %v210
    %v218 = vmul.f32 %v204, %v210
    %v219 = vmul.f32 %v208, %v210
    %v220 = vmul.f32 %v180, %v211
    %v221 = vmul.f32 %v184, %v211
    %v222 = vmul.f32 %v188, %v211
    %v223 = vmul.f32 %v192, %v211
    %v224 = vmul.f32 %v196, %v211
    %v225 = vmul.f32 %v200, %v211
    %v226 = vmul.f32 %v204, %v211
    %v227 = vmul.f32 %v208, %v211
    %v228 = vadd.f32 %v162, %v212
    %v229 = vadd.f32 %v163, %v213
    %v230 = vadd.f32 %v164, %v214
    %v231 = vadd.f32 %v165, %v215
    %v232 = vadd.f32 %v166, %v216
    %v233 = vadd.f32 %v167, %v217
    %v234 = vadd.f32 %v168, %v218
    %v235 = vadd.f32 %v169, %v219
    %v236 = vadd.f32 %v170, %v220
    %v237 = vadd.f32 %v171, %v221
    %v238 = vadd.f32 %v172, %v222
    %v239 = vadd.f32 %v173, %v223
    %v240 = vadd.f32 %v174, %v224
    %v241 = vadd.f32 %v175, %v225
    %v242 = vadd.f32 %v176, %v226
    %v243 = vadd.f32 %v177, %v227
    %v244 = vld [vmem:[%s2] sm:$0xff]
    %v245 = vld [vmem:[%s2 + $0x8] sm:$0xff]
    %v246 = vld [vmem:[%s2 + $0x10] sm:$0xff]
    %v247 = vld [vmem:[%s2 + $0x18] sm:$0xff]
    %v248 = vld [vmem:[%s2 + $0x20] sm:$0xff]
    %v249 = vld [vmem:[%s2 + $0x28] sm:$0xff]
    %v250 = vld [vmem:[%s2 + $0x30] sm:$0xff]
    %v251 = vld [vmem:[%s2 + $0x38] sm:$0xff]
    %253 = vset.pattern.permute.xlu0 0
    %254 = vperm.xlu0 %253, %v244
    %v255 = vpop.permute.xlu0 %254
    %258 = vset.pattern.permute.xlu0 0
    %259 = vperm.xlu0 %258, %v245
    %v260 = vpop.permute.xlu0 %259
    %263 = vset.pattern.permute.xlu0 0
    %264 = vperm.xlu0 %263, %v246
    %v265 = vpop.permute.xlu0 %264
    %268 = vset.pattern.permute.xlu0 0
    %269 = vperm.xlu0 %268, %v247
    %v270 = vpop.permute.xlu0 %269
    %273 = vset.pattern.permute.xlu0 0
    %274 = vperm.xlu0 %273, %v248
    %v275 = vpop.permute.xlu0 %274
    %278 = vset.pattern.permute.xlu0 0
    %279 = vperm.xlu0 %278, %v249
    %v280 = vpop.permute.xlu0 %279
    %283 = vset.pattern.permute.xlu0 0
    %284 = vperm.xlu0 %283, %v250
    %v285 = vpop.permute.xlu0 %284
    %288 = vset.pattern.permute.xlu0 0
    %289 = vperm.xlu0 %288, %v251
    %v290 = vpop.permute.xlu0 %289
    %v292 = vadd.f32 %v228, %v255
    %v293 = vadd.f32 %v229, %v260
    %v294 = vadd.f32 %v230, %v265
    %v295 = vadd.f32 %v231, %v270
    %v296 = vadd.f32 %v232, %v275
    %v297 = vadd.f32 %v233, %v280
    %v298 = vadd.f32 %v234, %v285
    %v299 = vadd.f32 %v235, %v290
    %v300 = vadd.f32 %v236, %v255
    %v301 = vadd.f32 %v237, %v260
    %v302 = vadd.f32 %v238, %v265
    %v303 = vadd.f32 %v239, %v270
    %v304 = vadd.f32 %v240, %v275
    %v305 = vadd.f32 %v241, %v280
    %v306 = vadd.f32 %v242, %v285
    %v307 = vadd.f32 %v243, %v290
    %v308 = vmax.f32 %v292, 0.0
    %v309 = vmax.f32 %v293, 0.0
    %v310 = vmax.f32 %v294, 0.0
    %v311 = vmax.f32 %v295, 0.0
    %v312 = vmax.f32 %v296, 0.0
    %v313 = vmax.f32 %v297, 0.0
    %v314 = vmax.f32 %v298, 0.0
    %v315 = vmax.f32 %v299, 0.0
    %v316 = vmax.f32 %v300, 0.0
    %v317 = vmax.f32 %v301, 0.0
    %v318 = vmax.f32 %v302, 0.0
    %v319 = vmax.f32 %v303, 0.0
    %v320 = vmax.f32 %v304, 0.0
    %v321 = vmax.f32 %v305, 0.0
    %v322 = vmax.f32 %v306, 0.0
    %v323 = vmax.f32 %v307, 0.0
    %324 = vxpose.xlu0.b32.start [1/16] %v308, 128
    %325 = vxpose.xlu0.b32.cont [2/16] %v309, 128
    %326 = vxpose.xlu0.b32.cont [3/16] %v310, 128
    %327 = vxpose.xlu0.b32.cont [4/16] %v311, 128
    %328 = vxpose.xlu0.b32.cont [5/16] %v312, 128
    %329 = vxpose.xlu0.b32.cont [6/16] %v313, 128
    %330 = vxpose.xlu0.b32.cont [7/16] %v314, 128
    %331 = vxpose.xlu0.b32.cont [8/16] %v315, 128
    %332 = vxpose.xlu0.b32.cont [9/16] 0.0, 128
    %333 = vxpose.xlu0.b32.cont [10/16] 0.0, 128
    %334 = vxpose.xlu0.b32.cont [11/16] 0.0, 128
    %335 = vxpose.xlu0.b32.cont [12/16] 0.0, 128
    %336 = vxpose.xlu0.b32.cont [13/16] 0.0, 128
    %337 = vxpose.xlu0.b32.cont [14/16] 0.0, 128
    %338 = vxpose.xlu0.b32.cont [15/16] 0.0, 128
    %339 = vxpose.xlu0.b32.end [16/16] 0.0, 128
    %v340 = vpop.trf.xlu0
    %v341 = vpop.trf.xlu0
    %v342 = vpop.trf.xlu0
    %v343 = vpop.trf.xlu0
    %v344 = vpop.trf.xlu0
    %v345 = vpop.trf.xlu0
    %v346 = vpop.trf.xlu0
    %v347 = vpop.trf.xlu0
    %v348 = vpop.trf.xlu0
    %v349 = vpop.trf.xlu0
    %v350 = vpop.trf.xlu0
    %v351 = vpop.trf.xlu0
    %v352 = vpop.trf.xlu0
    %v353 = vpop.trf.xlu0
    %v354 = vpop.trf.xlu0
    %v355 = vpop.trf.xlu0
    %356 = vxpose.xlu0.b32.start [1/16] %v316, 128
    %357 = vxpose.xlu0.b32.cont [2/16] %v317, 128
    %358 = vxpose.xlu0.b32.cont [3/16] %v318, 128
    %359 = vxpose.xlu0.b32.cont [4/16] %v319, 128
    %360 = vxpose.xlu0.b32.cont [5/16] %v320, 128
    %361 = vxpose.xlu0.b32.cont [6/16] %v321, 128
    %362 = vxpose.xlu0.b32.cont [7/16] %v322, 128
    %363 = vxpose.xlu0.b32.cont [8/16] %v323, 128
    %364 = vxpose.xlu0.b32.cont [9/16] 0.0, 128
    %365 = vxpose.xlu0.b32.cont [10/16] 0.0, 128
    %366 = vxpose.xlu0.b32.cont [11/16] 0.0, 128
    %367 = vxpose.xlu0.b32.cont [12/16] 0.0, 128
    %368 = vxpose.xlu0.b32.cont [13/16] 0.0, 128
    %369 = vxpose.xlu0.b32.cont [14/16] 0.0, 128
    %370 = vxpose.xlu0.b32.cont [15/16] 0.0, 128
    %371 = vxpose.xlu0.b32.end [16/16] 0.0, 128
    %v372 = vpop.trf.xlu0
    %v373 = vpop.trf.xlu0
    %v374 = vpop.trf.xlu0
    %v375 = vpop.trf.xlu0
    %v376 = vpop.trf.xlu0
    %v377 = vpop.trf.xlu0
    %v378 = vpop.trf.xlu0
    %v379 = vpop.trf.xlu0
    %v380 = vpop.trf.xlu0
    %v381 = vpop.trf.xlu0
    %v382 = vpop.trf.xlu0
    %v383 = vpop.trf.xlu0
    %v384 = vpop.trf.xlu0
    %v385 = vpop.trf.xlu0
    %v386 = vpop.trf.xlu0
    %v387 = vpop.trf.xlu0
    %v388 = vpack.c.bf16 %v341, %v340
    %v389 = vpack.c.bf16 %v343, %v342
    %v390 = vpack.c.bf16 %v345, %v344
    %v391 = vpack.c.bf16 %v347, %v346
    %v392 = vpack.c.bf16 %v349, %v348
    %v393 = vpack.c.bf16 %v351, %v350
    %v394 = vpack.c.bf16 %v353, %v352
    %v395 = vpack.c.bf16 %v355, %v354
    %v396 = vpack.c.bf16 %v373, %v372
    %v397 = vpack.c.bf16 %v375, %v374
    %v398 = vpack.c.bf16 %v377, %v376
    %v399 = vpack.c.bf16 %v379, %v378
    %v400 = vpack.c.bf16 %v381, %v380
    %v401 = vpack.c.bf16 %v383, %v382
    %v402 = vpack.c.bf16 %v385, %v384
    %v403 = vpack.c.bf16 %v387, %v386
    %v404 = vld [vmem:[%s3] sm:$0xf]
    %v405 = vld [vmem:[%s3 + $0x4] sm:$0xf]
    %v406 = vld [vmem:[%s3 + $0x8] sm:$0xf]
    %v407 = vld [vmem:[%s3 + $0xc] sm:$0xf]
    %v408 = vld [vmem:[%s3 + $0x10] sm:$0xf]
    %v409 = vld [vmem:[%s3 + $0x14] sm:$0xf]
    %v410 = vld [vmem:[%s3 + $0x18] sm:$0xf]
    %v411 = vld [vmem:[%s3 + $0x1c] sm:$0xf]
    %v412 = vld [vmem:[%s4] sm:$0x1]
    %v414 = vperm.slane %v412, 0
    %v424 = vunpack.c.l.b16 %v404
    %v425 = vunpack.c.l.b16 %v405
    %v426 = vunpack.c.l.b16 %v406
    %v427 = vunpack.c.l.b16 %v407
    %v428 = vunpack.c.l.b16 %v408
    %v429 = vunpack.c.l.b16 %v409
    %v430 = vunpack.c.l.b16 %v410
    %v431 = vunpack.c.l.b16 %v411
    %v432 = vpack.c.b16 %v425, %v424
    %v433 = vpack.c.b16 %v427, %v426
    %v434 = vpack.c.b16 %v429, %v428
    %v435 = vpack.c.b16 %v431, %v430
    %vm440 = vcmask 523264
    %v442 = vsel %vm440, %v388, 0
    %v445 = vsel %vm440, %v389, 0
    %v448 = vsel %vm440, %v390, 0
    %v451 = vsel %vm440, %v391, 0
    %v454 = vsel %vm440, %v392, 0
    %v457 = vsel %vm440, %v393, 0
    %v460 = vsel %vm440, %v394, 0
    %v463 = vsel %vm440, %v395, 0
    %v466 = vsel %vm440, %v396, 0
    %v469 = vsel %vm440, %v397, 0
    %v472 = vsel %vm440, %v398, 0
    %v475 = vsel %vm440, %v399, 0
    %v478 = vsel %vm440, %v400, 0
    %v481 = vsel %vm440, %v401, 0
    %v484 = vsel %vm440, %v402, 0
    %v487 = vsel %vm440, %v403, 0
    %489 = vmatpush.bf16.msra.mxu0 0
    %490 = vmatpush.bf16.msra.mxu0 0
    %491 = vmatpush.bf16.msra.mxu0 0
    %492 = vmatpush.bf16.msra.mxu0 0
    %493 = vmatpush.bf16.msra.mxu0 %v435
    %494 = vmatpush.bf16.msra.mxu0 %v434
    %495 = vmatpush.bf16.msra.mxu0 %v433
    %496 = vmatpush.bf16.msra.mxu0 %v432
    %497 = vmatmul.bf16.gmra.mxu0 %v442
    %v498 = vpop.f32.mrf.mxu0
    %v499 = vadd.f32 %v414, %v498
    %v500 = vpop.f32.mrf.mxu0
    %v501 = vadd.f32 %v414, %v500
    %502 = vmatmul.bf16.gmra.mxu0 %v445
    %v503 = vpop.f32.mrf.mxu0
    %v504 = vadd.f32 %v414, %v503
    %v505 = vpop.f32.mrf.mxu0
    %v506 = vadd.f32 %v414, %v505
    %507 = vmatmul.bf16.gmra.mxu0 %v448
    %v508 = vpop.f32.mrf.mxu0
    %v509 = vadd.f32 %v414, %v508
    %v510 = vpop.f32.mrf.mxu0
    %v511 = vadd.f32 %v414, %v510
    %512 = vmatmul.bf16.gmra.mxu0 %v451
    %v513 = vpop.f32.mrf.mxu0
    %v514 = vadd.f32 %v414, %v513
    %v515 = vpop.f32.mrf.mxu0
    %v516 = vadd.f32 %v414, %v515
    %517 = vmatmul.bf16.gmra.mxu0 %v454
    %v518 = vpop.f32.mrf.mxu0
    %v519 = vadd.f32 %v414, %v518
    %v520 = vpop.f32.mrf.mxu0
    %v521 = vadd.f32 %v414, %v520
    %522 = vmatmul.bf16.gmra.mxu0 %v457
    %v523 = vpop.f32.mrf.mxu0
    %v524 = vadd.f32 %v414, %v523
    %v525 = vpop.f32.mrf.mxu0
    %v526 = vadd.f32 %v414, %v525
    %527 = vmatmul.bf16.gmra.mxu0 %v460
    %v528 = vpop.f32.mrf.mxu0
    %v529 = vadd.f32 %v414, %v528
    %v530 = vpop.f32.mrf.mxu0
    %v531 = vadd.f32 %v414, %v530
    %532 = vmatmul.bf16.gmra.mxu0 %v463
    %v533 = vpop.f32.mrf.mxu0
    %v534 = vadd.f32 %v414, %v533
    %v535 = vpop.f32.mrf.mxu0
    %v536 = vadd.f32 %v414, %v535
    %537 = vmatmul.bf16.gmra.mxu0 %v466
    %v538 = vpop.f32.mrf.mxu0
    %v539 = vadd.f32 %v414, %v538
    %v540 = vpop.f32.mrf.mxu0
    %v541 = vadd.f32 %v414, %v540
    %542 = vmatmul.bf16.gmra.mxu0 %v469
    %v543 = vpop.f32.mrf.mxu0
    %v544 = vadd.f32 %v414, %v543
    %v545 = vpop.f32.mrf.mxu0
    %v546 = vadd.f32 %v414, %v545
    %547 = vmatmul.bf16.gmra.mxu0 %v472
    %v548 = vpop.f32.mrf.mxu0
    %v549 = vadd.f32 %v414, %v548
    %v550 = vpop.f32.mrf.mxu0
    %v551 = vadd.f32 %v414, %v550
    %552 = vmatmul.bf16.gmra.mxu0 %v475
    %v553 = vpop.f32.mrf.mxu0
    %v554 = vadd.f32 %v414, %v553
    %v555 = vpop.f32.mrf.mxu0
    %v556 = vadd.f32 %v414, %v555
    %557 = vmatmul.bf16.gmra.mxu0 %v478
    %v558 = vpop.f32.mrf.mxu0
    %v559 = vadd.f32 %v414, %v558
    %v560 = vpop.f32.mrf.mxu0
    %v561 = vadd.f32 %v414, %v560
    %562 = vmatmul.bf16.gmra.mxu0 %v481
    %v563 = vpop.f32.mrf.mxu0
    %v564 = vadd.f32 %v414, %v563
    %v565 = vpop.f32.mrf.mxu0
    %v566 = vadd.f32 %v414, %v565
    %567 = vmatmul.bf16.gmra.mxu0 %v484
    %v568 = vpop.f32.mrf.mxu0
    %v569 = vadd.f32 %v414, %v568
    %v570 = vpop.f32.mrf.mxu0
    %v571 = vadd.f32 %v414, %v570
    %572 = vmatmul.bf16.gmra.mxu0 %v487
    %v573 = vpop.f32.mrf.mxu0
    %v574 = vadd.f32 %v414, %v573
    %v575 = vpop.f32.mrf.mxu0
    %v576 = vadd.f32 %v414, %v575
    %577 = vdwg.mxu0
    %v578 = vmax.f32 %v499, 0.0
    %v579 = vmax.f32 %v501, 0.0
    %v580 = vmax.f32 %v504, 0.0
    %v581 = vmax.f32 %v506, 0.0
    %v582 = vmax.f32 %v509, 0.0
    %v583 = vmax.f32 %v511, 0.0
    %v584 = vmax.f32 %v514, 0.0
    %v585 = vmax.f32 %v516, 0.0
    %v586 = vmax.f32 %v519, 0.0
    %v587 = vmax.f32 %v521, 0.0
    %v588 = vmax.f32 %v524, 0.0
    %v589 = vmax.f32 %v526, 0.0
    %v590 = vmax.f32 %v529, 0.0
    %v591 = vmax.f32 %v531, 0.0
    %v592 = vmax.f32 %v534, 0.0
    %v593 = vmax.f32 %v536, 0.0
    %v594 = vmax.f32 %v539, 0.0
    %v595 = vmax.f32 %v541, 0.0
    %v596 = vmax.f32 %v544, 0.0
    %v597 = vmax.f32 %v546, 0.0
    %v598 = vmax.f32 %v549, 0.0
    %v599 = vmax.f32 %v551, 0.0
    %v600 = vmax.f32 %v554, 0.0
    %v601 = vmax.f32 %v556, 0.0
    %v602 = vmax.f32 %v559, 0.0
    %v603 = vmax.f32 %v561, 0.0
    %v604 = vmax.f32 %v564, 0.0
    %v605 = vmax.f32 %v566, 0.0
    %v606 = vmax.f32 %v569, 0.0
    %v607 = vmax.f32 %v571, 0.0
    %v608 = vmax.f32 %v574, 0.0
    %v609 = vmax.f32 %v576, 0.0
    %v610 = vpack.c.bf16 %v579, %v578
    %v611 = vpack.c.bf16 %v581, %v580
    %v612 = vpack.c.bf16 %v583, %v582
    %v613 = vpack.c.bf16 %v585, %v584
    %v614 = vpack.c.bf16 %v587, %v586
    %v615 = vpack.c.bf16 %v589, %v588
    %v616 = vpack.c.bf16 %v591, %v590
    %v617 = vpack.c.bf16 %v593, %v592
    %v618 = vpack.c.bf16 %v595, %v594
    %v619 = vpack.c.bf16 %v597, %v596
    %v620 = vpack.c.bf16 %v599, %v598
    %v621 = vpack.c.bf16 %v601, %v600
    %v622 = vpack.c.bf16 %v603, %v602
    %v623 = vpack.c.bf16 %v605, %v604
    %v624 = vpack.c.bf16 %v607, %v606
    %v625 = vpack.c.bf16 %v609, %v608
    %v626 = vld [vmem:[#allocation2] sm:$0xff]
    %v627 = vld [vmem:[#allocation2 + $0x20] sm:$0xff]
    %v628 = vld [vmem:[#allocation2 + $0x40] sm:$0xff]
    %v629 = vld [vmem:[#allocation2 + $0x60] sm:$0xff]
    %v630 = vld [vmem:[#allocation2 + $0x80] sm:$0xff]
    %v631 = vld [vmem:[#allocation2 + $0xa0] sm:$0xff]
    %v632 = vld [vmem:[#allocation2 + $0xc0] sm:$0xff]
    %v633 = vld [vmem:[#allocation2 + $0xe0] sm:$0xff]
    %v634 = vld [vmem:[#allocation2 + $0x100] sm:$0xff]
    %v635 = vld [vmem:[#allocation2 + $0x120] sm:$0xff]
    %v636 = vld [vmem:[#allocation2 + $0x140] sm:$0xff]
    %v637 = vld [vmem:[#allocation2 + $0x160] sm:$0xff]
    %v638 = vld [vmem:[#allocation2 + $0x180] sm:$0xff]
    %v639 = vld [vmem:[#allocation2 + $0x1a0] sm:$0xff]
    %v640 = vld [vmem:[#allocation2 + $0x1c0] sm:$0xff]
    %v641 = vld [vmem:[#allocation2 + $0x1e0] sm:$0xff]
    %v658 = vunpack.c.l.b16 %v626
    %v659 = vunpack.c.h.b16 %v626
    %v660 = vunpack.c.l.b16 %v627
    %v661 = vunpack.c.h.b16 %v627
    %v662 = vunpack.c.l.b16 %v628
    %v663 = vunpack.c.h.b16 %v628
    %v664 = vunpack.c.l.b16 %v629
    %v665 = vunpack.c.h.b16 %v629
    %v666 = vunpack.c.l.b16 %v630
    %v667 = vunpack.c.h.b16 %v630
    %v668 = vunpack.c.l.b16 %v631
    %v669 = vunpack.c.h.b16 %v631
    %v670 = vunpack.c.l.b16 %v632
    %v671 = vunpack.c.h.b16 %v632
    %v672 = vunpack.c.l.b16 %v633
    %v673 = vunpack.c.h.b16 %v633
    %v674 = vunpack.c.l.b16 %v634
    %v675 = vunpack.c.h.b16 %v634
    %v676 = vunpack.c.l.b16 %v635
    %v677 = vunpack.c.h.b16 %v635
    %v678 = vunpack.c.l.b16 %v636
    %v679 = vunpack.c.h.b16 %v636
    %v680 = vunpack.c.l.b16 %v637
    %v681 = vunpack.c.h.b16 %v637
    %v682 = vunpack.c.l.b16 %v638
    %v683 = vunpack.c.h.b16 %v638
    %v684 = vunpack.c.l.b16 %v639
    %v685 = vunpack.c.h.b16 %v639
    %v686 = vunpack.c.l.b16 %v640
    %v687 = vunpack.c.h.b16 %v640
    %v688 = vunpack.c.l.b16 %v641
    %v689 = vunpack.c.h.b16 %v641
    %v690 = vpack.c.b16 %v660, %v658
    %v691 = vpack.c.b16 %v661, %v659
    %v692 = vpack.c.b16 %v664, %v662
    %v693 = vpack.c.b16 %v665, %v663
    %v694 = vpack.c.b16 %v668, %v666
    %v695 = vpack.c.b16 %v669, %v667
    %v696 = vpack.c.b16 %v672, %v670
    %v697 = vpack.c.b16 %v673, %v671
    %v698 = vpack.c.b16 %v676, %v674
    %v699 = vpack.c.b16 %v677, %v675
    %v700 = vpack.c.b16 %v680, %v678
    %v701 = vpack.c.b16 %v681, %v679
    %v702 = vpack.c.b16 %v684, %v682
    %v703 = vpack.c.b16 %v685, %v683
    %v704 = vpack.c.b16 %v688, %v686
    %v705 = vpack.c.b16 %v689, %v687
    %722 = vmatpush.bf16.msra.mxu0 %v704
    %723 = vmatpush.bf16.msra.mxu0 %v702
    %724 = vmatpush.bf16.msra.mxu0 %v700
    %725 = vmatpush.bf16.msra.mxu0 %v698
    %726 = vmatpush.bf16.msra.mxu0 %v696
    %727 = vmatpush.bf16.msra.mxu0 %v694
    %728 = vmatpush.bf16.msra.mxu0 %v692
    %729 = vmatpush.bf16.msra.mxu0 %v690
    %730 = vmatmul.bf16.gmra.mxu0 %v610
    %v731 = vpop.f32.mrf.mxu0
    %v732 = vadd.f32 0.0, %v731
    %v733 = vpop.f32.mrf.mxu0
    %v734 = vadd.f32 0.0, %v733
    %735 = vmatmul.bf16.gmra.mxu0 %v611
    %v736 = vpop.f32.mrf.mxu0
    %v737 = vadd.f32 0.0, %v736
    %v738 = vpop.f32.mrf.mxu0
    %v739 = vadd.f32 0.0, %v738
    %740 = vmatmul.bf16.gmra.mxu0 %v612
    %v741 = vpop.f32.mrf.mxu0
    %v742 = vadd.f32 0.0, %v741
    %v743 = vpop.f32.mrf.mxu0
    %v744 = vadd.f32 0.0, %v743
    %745 = vmatmul.bf16.gmra.mxu0 %v613
    %v746 = vpop.f32.mrf.mxu0
    %v747 = vadd.f32 0.0, %v746
    %v748 = vpop.f32.mrf.mxu0
    %v749 = vadd.f32 0.0, %v748
    %750 = vmatmul.bf16.gmra.mxu0 %v614
    %v751 = vpop.f32.mrf.mxu0
    %v752 = vadd.f32 0.0, %v751
    %v753 = vpop.f32.mrf.mxu0
    %v754 = vadd.f32 0.0, %v753
    %755 = vmatmul.bf16.gmra.mxu0 %v615
    %v756 = vpop.f32.mrf.mxu0
    %v757 = vadd.f32 0.0, %v756
    %v758 = vpop.f32.mrf.mxu0
    %v759 = vadd.f32 0.0, %v758
    %760 = vmatmul.bf16.gmra.mxu0 %v616
    %v761 = vpop.f32.mrf.mxu0
    %v762 = vadd.f32 0.0, %v761
    %v763 = vpop.f32.mrf.mxu0
    %v764 = vadd.f32 0.0, %v763
    %765 = vmatmul.bf16.gmra.mxu0 %v617
    %v766 = vpop.f32.mrf.mxu0
    %v767 = vadd.f32 0.0, %v766
    %v768 = vpop.f32.mrf.mxu0
    %v769 = vadd.f32 0.0, %v768
    %770 = vmatmul.bf16.gmra.mxu0 %v618
    %v771 = vpop.f32.mrf.mxu0
    %v772 = vadd.f32 0.0, %v771
    %v773 = vpop.f32.mrf.mxu0
    %v774 = vadd.f32 0.0, %v773
    %775 = vmatmul.bf16.gmra.mxu0 %v619
    %v776 = vpop.f32.mrf.mxu0
    %v777 = vadd.f32 0.0, %v776
    %v778 = vpop.f32.mrf.mxu0
    %v779 = vadd.f32 0.0, %v778
    %780 = vmatmul.bf16.gmra.mxu0 %v620
    %v781 = vpop.f32.mrf.mxu0
    %v782 = vadd.f32 0.0, %v781
    %v783 = vpop.f32.mrf.mxu0
    %v784 = vadd.f32 0.0, %v783
    %785 = vmatmul.bf16.gmra.mxu0 %v621
    %v786 = vpop.f32.mrf.mxu0
    %v787 = vadd.f32 0.0, %v786
    %v788 = vpop.f32.mrf.mxu0
    %v789 = vadd.f32 0.0, %v788
    %790 = vmatmul.bf16.gmra.mxu0 %v622
    %v791 = vpop.f32.mrf.mxu0
    %v792 = vadd.f32 0.0, %v791
    %v793 = vpop.f32.mrf.mxu0
    %v794 = vadd.f32 0.0, %v793
    %795 = vmatmul.bf16.gmra.mxu0 %v623
    %v796 = vpop.f32.mrf.mxu0
    %v797 = vadd.f32 0.0, %v796
    %v798 = vpop.f32.mrf.mxu0
    %v799 = vadd.f32 0.0, %v798
    %800 = vmatmul.bf16.gmra.mxu0 %v624
    %v801 = vpop.f32.mrf.mxu0
    %v802 = vadd.f32 0.0, %v801
    %v803 = vpop.f32.mrf.mxu0
    %v804 = vadd.f32 0.0, %v803
    %805 = vmatmul.bf16.gmra.mxu0 %v625
    %v806 = vpop.f32.mrf.mxu0
    %v807 = vadd.f32 0.0, %v806
    %v808 = vpop.f32.mrf.mxu0
    %v809 = vadd.f32 0.0, %v808
    %810 = vdwg.mxu0
    %811 = vmatpush.bf16.msra.mxu0 %v705
    %812 = vmatpush.bf16.msra.mxu0 %v703
    %813 = vmatpush.bf16.msra.mxu0 %v701
    %814 = vmatpush.bf16.msra.mxu0 %v699
    %815 = vmatpush.bf16.msra.mxu0 %v697
    %816 = vmatpush.bf16.msra.mxu0 %v695
    %817 = vmatpush.bf16.msra.mxu0 %v693
    %818 = vmatpush.bf16.msra.mxu0 %v691
    %819 = vmatmul.bf16.gmra.mxu0 %v610
    %v820 = vpop.f32.mrf.mxu0
    %v821 = vadd.f32 0.0, %v820
    %v822 = vpop.f32.mrf.mxu0
    %v823 = vadd.f32 0.0, %v822
    %824 = vmatmul.bf16.gmra.mxu0 %v611
    %v825 = vpop.f32.mrf.mxu0
    %v826 = vadd.f32 0.0, %v825
    %v827 = vpop.f32.mrf.mxu0
    %v828 = vadd.f32 0.0, %v827
    %829 = vmatmul.bf16.gmra.mxu0 %v612
    %v830 = vpop.f32.mrf.mxu0
    %v831 = vadd.f32 0.0, %v830
    %v832 = vpop.f32.mrf.mxu0
    %v833 = vadd.f32 0.0, %v832
    %834 = vmatmul.bf16.gmra.mxu0 %v613
    %v835 = vpop.f32.mrf.mxu0
    %v836 = vadd.f32 0.0, %v835
    %v837 = vpop.f32.mrf.mxu0
    %v838 = vadd.f32 0.0, %v837
    %839 = vmatmul.bf16.gmra.mxu0 %v614
    %v840 = vpop.f32.mrf.mxu0
    %v841 = vadd.f32 0.0, %v840
    %v842 = vpop.f32.mrf.mxu0
    %v843 = vadd.f32 0.0, %v842
    %844 = vmatmul.bf16.gmra.mxu0 %v615
    %v845 = vpop.f32.mrf.mxu0
    %v846 = vadd.f32 0.0, %v845
    %v847 = vpop.f32.mrf.mxu0
    %v848 = vadd.f32 0.0, %v847
    %849 = vmatmul.bf16.gmra.mxu0 %v616
    %v850 = vpop.f32.mrf.mxu0
    %v851 = vadd.f32 0.0, %v850
    %v852 = vpop.f32.mrf.mxu0
    %v853 = vadd.f32 0.0, %v852
    %854 = vmatmul.bf16.gmra.mxu0 %v617
    %v855 = vpop.f32.mrf.mxu0
    %v856 = vadd.f32 0.0, %v855
    %v857 = vpop.f32.mrf.mxu0
    %v858 = vadd.f32 0.0, %v857
    %859 = vmatmul.bf16.gmra.mxu0 %v618
    %v860 = vpop.f32.mrf.mxu0
    %v861 = vadd.f32 0.0, %v860
    %v862 = vpop.f32.mrf.mxu0
    %v863 = vadd.f32 0.0, %v862
    %864 = vmatmul.bf16.gmra.mxu0 %v619
    %v865 = vpop.f32.mrf.mxu0
    %v866 = vadd.f32 0.0, %v865
    %v867 = vpop.f32.mrf.mxu0
    %v868 = vadd.f32 0.0, %v867
    %869 = vmatmul.bf16.gmra.mxu0 %v620
    %v870 = vpop.f32.mrf.mxu0
    %v871 = vadd.f32 0.0, %v870
    %v872 = vpop.f32.mrf.mxu0
    %v873 = vadd.f32 0.0, %v872
    %874 = vmatmul.bf16.gmra.mxu0 %v621
    %v875 = vpop.f32.mrf.mxu0
    %v876 = vadd.f32 0.0, %v875
    %v877 = vpop.f32.mrf.mxu0
    %v878 = vadd.f32 0.0, %v877
    %879 = vmatmul.bf16.gmra.mxu0 %v622
    %v880 = vpop.f32.mrf.mxu0
    %v881 = vadd.f32 0.0, %v880
    %v882 = vpop.f32.mrf.mxu0
    %v883 = vadd.f32 0.0, %v882
    %884 = vmatmul.bf16.gmra.mxu0 %v623
    %v885 = vpop.f32.mrf.mxu0
    %v886 = vadd.f32 0.0, %v885
    %v887 = vpop.f32.mrf.mxu0
    %v888 = vadd.f32 0.0, %v887
    %889 = vmatmul.bf16.gmra.mxu0 %v624
    %v890 = vpop.f32.mrf.mxu0
    %v891 = vadd.f32 0.0, %v890
    %v892 = vpop.f32.mrf.mxu0
    %v893 = vadd.f32 0.0, %v892
    %894 = vmatmul.bf16.gmra.mxu0 %v625
    %v895 = vpop.f32.mrf.mxu0
    %v896 = vadd.f32 0.0, %v895
    %v897 = vpop.f32.mrf.mxu0
    %v898 = vadd.f32 0.0, %v897
    %899 = vdwg.mxu0
    %v900 = vmax.f32 %v732, %v734
    %v901 = vmax.f32 %v900, %v737
    %v902 = vmax.f32 %v901, %v739
    %v903 = vmax.f32 %v902, %v742
    %v904 = vmax.f32 %v903, %v744
    %v905 = vmax.f32 %v904, %v747
    %v906 = vmax.f32 %v905, %v749
    %v907 = vmax.f32 %v906, %v752
    %v908 = vmax.f32 %v907, %v754
    %v909 = vmax.f32 %v908, %v757
    %v910 = vmax.f32 %v909, %v759
    %v911 = vmax.f32 %v910, %v762
    %v912 = vmax.f32 %v911, %v764
    %v913 = vmax.f32 %v912, %v767
    %v914 = vmax.f32 %v913, %v769
    %v915 = vrot.slane %v914, 4
    %v916 = vmax.f32 %v914, %v915
    %v917 = vrot.slane %v916, 2
    %v918 = vmax.f32 %v916, %v917
    %v919 = vrot.slane %v918, 1
    %v920 = vmax.f32 %v918, %v919
    %v921 = vmax.f32 %v821, %v823
    %v922 = vmax.f32 %v921, %v826
    %v923 = vmax.f32 %v922, %v828
    %v924 = vmax.f32 %v923, %v831
    %v925 = vmax.f32 %v924, %v833
    %v926 = vmax.f32 %v925, %v836
    %v927 = vmax.f32 %v926, %v838
    %v928 = vmax.f32 %v927, %v841
    %v929 = vmax.f32 %v928, %v843
    %v930 = vmax.f32 %v929, %v846
    %v931 = vmax.f32 %v930, %v848
    %v932 = vmax.f32 %v931, %v851
    %v933 = vmax.f32 %v932, %v853
    %v934 = vmax.f32 %v933, %v856
    %v935 = vmax.f32 %v934, %v858
    %v936 = vrot.slane %v935, 4
    %v937 = vmax.f32 %v935, %v936
    %v938 = vrot.slane %v937, 2
    %v939 = vmax.f32 %v937, %v938
    %v940 = vrot.slane %v939, 1
    %v941 = vmax.f32 %v939, %v940
    %v942 = vmax.f32 %v772, %v774
    %v943 = vmax.f32 %v942, %v777
    %v944 = vmax.f32 %v943, %v779
    %v945 = vmax.f32 %v944, %v782
    %v946 = vmax.f32 %v945, %v784
    %v947 = vmax.f32 %v946, %v787
    %v948 = vmax.f32 %v947, %v789
    %v949 = vmax.f32 %v948, %v792
    %v950 = vmax.f32 %v949, %v794
    %v951 = vmax.f32 %v950, %v797
    %v952 = vmax.f32 %v951, %v799
    %v953 = vmax.f32 %v952, %v802
    %v954 = vmax.f32 %v953, %v804
    %v955 = vmax.f32 %v954, %v807
    %v956 = vmax.f32 %v955, %v809
    %v957 = vrot.slane %v956, 4
    %v958 = vmax.f32 %v956, %v957
    %v959 = vrot.slane %v958, 2
    %v960 = vmax.f32 %v958, %v959
    %v961 = vrot.slane %v960, 1
    %v962 = vmax.f32 %v960, %v961
    %v963 = vmax.f32 %v861, %v863
    %v964 = vmax.f32 %v963, %v866
    %v965 = vmax.f32 %v964, %v868
    %v966 = vmax.f32 %v965, %v871
    %v967 = vmax.f32 %v966, %v873
    %v968 = vmax.f32 %v967, %v876
    %v969 = vmax.f32 %v968, %v878
    %v970 = vmax.f32 %v969, %v881
    %v971 = vmax.f32 %v970, %v883
    %v972 = vmax.f32 %v971, %v886
    %v973 = vmax.f32 %v972, %v888
    %v974 = vmax.f32 %v973, %v891
    %v975 = vmax.f32 %v974, %v893
    %v976 = vmax.f32 %v975, %v896
    %v977 = vmax.f32 %v976, %v898
    %v978 = vrot.slane %v977, 4
    %v979 = vmax.f32 %v977, %v978
    %v980 = vrot.slane %v979, 2
    %v981 = vmax.f32 %v979, %v980
    %v982 = vrot.slane %v981, 1
    %v983 = vmax.f32 %v981, %v982
    %v984 = vld [vmem:[%s6] sm:$0x3]
    %v986 = vperm.slane %v984, 0
    %v987 = vperm.slane %v984, 1
    %v990 = vadd.f32 %v920, %v986
    %v991 = vadd.f32 %v941, %v987
    %v992 = vadd.f32 %v962, %v986
    %v993 = vadd.f32 %v983, %v987
    %v994 = vmax.f32 %v990, 0.0
    %v995 = vmax.f32 %v991, 0.0
    %v996 = vmax.f32 %v992, 0.0
    %v997 = vmax.f32 %v993, 0.0
    %v1002 = vrot.slane %v995, 6
    %v1003 = vrot.slane %v997, 6
    %vm1004 = vcmask 1041408
    %v1005 = vsel %vm1004, %v994, %v1002
    %v1006 = vsel %vm1004, %v996, %v1003
    %vm1007 = vcmask 1044484
    %v1008 = vsel %vm1007, %v1005, %v1005
    %vm1009 = vcmask 1046534
    %v1010 = vsel %vm1009, %v1005, %v1008
    %v1011 = vrot.slane %v1006, 7
    %vm1012 = vcmask 1041409
    %v1013 = vsel %vm1012, %v1011, %v1010
    %vm1014 = vcmask 1043459
    %v1015 = vsel %vm1014, %v1011, %v1013
    %vm1016 = vcmask 1045509
    %v1017 = vsel %vm1016, %v1011, %v1015
    %vm1018 = vcmask 1047559
    %v1019 = vsel %vm1018, %v1011, %v1017
    %1021 = vst [vmem:[#allocation5] sm:$0xf] %v1019
    %v1022 = vld [vmem:[#allocation2 + $0x8] sm:$0xff]
    %v1023 = vld [vmem:[#allocation2 + $0x28] sm:$0xff]
    %v1024 = vld [vmem:[#allocation2 + $0x48] sm:$0xff]
    %v1025 = vld [vmem:[#allocation2 + $0x68] sm:$0xff]
    %v1026 = vld [vmem:[#allocation2 + $0x88] sm:$0xff]
    %v1027 = vld [vmem:[#allocation2 + $0xa8] sm:$0xff]
    %v1028 = vld [vmem:[#allocation2 + $0xc8] sm:$0xff]
    %v1029 = vld [vmem:[#allocation2 + $0xe8] sm:$0xff]
    %v1030 = vld [vmem:[#allocation2 + $0x108] sm:$0xff]
    %v1031 = vld [vmem:[#allocation2 + $0x128] sm:$0xff]
    %v1032 = vld [vmem:[#allocation2 + $0x148] sm:$0xff]
    %v1033 = vld [vmem:[#allocation2 + $0x168] sm:$0xff]
    %v1034 = vld [vmem:[#allocation2 + $0x188] sm:$0xff]
    %v1035 = vld [vmem:[#allocation2 + $0x1a8] sm:$0xff]
    %v1036 = vld [vmem:[#allocation2 + $0x1c8] sm:$0xff]
    %v1037 = vld [vmem:[#allocation2 + $0x1e8] sm:$0xff]
    %v1054 = vunpack.c.l.b16 %v1022
    %v1055 = vunpack.c.h.b16 %v1022
    %v1056 = vunpack.c.l.b16 %v1023
    %v1057 = vunpack.c.h.b16 %v1023
    %v1058 = vunpack.c.l.b16 %v1024
    %v1059 = vunpack.c.h.b16 %v1024
    %v1060 = vunpack.c.l.b16 %v1025
    %v1061 = vunpack.c.h.b16 %v1025
    %v1062 = vunpack.c.l.b16 %v1026
    %v1063 = vunpack.c.h.b16 %v1026
    %v1064 = vunpack.c.l.b16 %v1027
    %v1065 = vunpack.c.h.b16 %v1027
    %v1066 = vunpack.c.l.b16 %v1028
    %v1067 = vunpack.c.h.b16 %v1028
    %v1068 = vunpack.c.l.b16 %v1029
    %v1069 = vunpack.c.h.b16 %v1029
    %v1070 = vunpack.c.l.b16 %v1030
    %v1071 = vunpack.c.h.b16 %v1030
    %v1072 = vunpack.c.l.b16 %v1031
    %v1073 = vunpack.c.h.b16 %v1031
    %v1074 = vunpack.c.l.b16 %v1032
    %v1075 = vunpack.c.h.b16 %v1032
    %v1076 = vunpack.c.l.b16 %v1033
    %v1077 = vunpack.c.h.b16 %v1033
    %v1078 = vunpack.c.l.b16 %v1034
    %v1079 = vunpack.c.h.b16 %v1034
    %v1080 = vunpack.c.l.b16 %v1035
    %v1081 = vunpack.c.h.b16 %v1035
    %v1082 = vunpack.c.l.b16 %v1036
    %v1083 = vunpack.c.h.b16 %v1036
    %v1084 = vunpack.c.l.b16 %v1037
    %v1085 = vunpack.c.h.b16 %v1037
    %v1086 = vpack.c.b16 %v1056, %v1054
    %v1087 = vpack.c.b16 %v1057, %v1055
    %v1088 = vpack.c.b16 %v1060, %v1058
    %v1089 = vpack.c.b16 %v1061, %v1059
    %v1090 = vpack.c.b16 %v1064, %v1062
    %v1091 = vpack.c.b16 %v1065, %v1063
    %v1092 = vpack.c.b16 %v1068, %v1066
    %v1093 = vpack.c.b16 %v1069, %v1067
    %v1094 = vpack.c.b16 %v1072, %v1070
    %v1095 = vpack.c.b16 %v1073, %v1071
    %v1096 = vpack.c.b16 %v1076, %v1074
    %v1097 = vpack.c.b16 %v1077, %v1075
    %v1098 = vpack.c.b16 %v1080, %v1078
    %v1099 = vpack.c.b16 %v1081, %v1079
    %v1100 = vpack.c.b16 %v1084, %v1082
    %v1101 = vpack.c.b16 %v1085, %v1083
    %1118 = vmatpush.bf16.msra.mxu0 %v1100
    %1119 = vmatpush.bf16.msra.mxu0 %v1098
    %1120 = vmatpush.bf16.msra.mxu0 %v1096
    %1121 = vmatpush.bf16.msra.mxu0 %v1094
    %1122 = vmatpush.bf16.msra.mxu0 %v1092
    %1123 = vmatpush.bf16.msra.mxu0 %v1090
    %1124 = vmatpush.bf16.msra.mxu0 %v1088
    %1125 = vmatpush.bf16.msra.mxu0 %v1086
    %1126 = vmatmul.bf16.gmra.mxu0 %v610
    %v1127 = vpop.f32.mrf.mxu0
    %v1128 = vadd.f32 0.0, %v1127
    %v1129 = vpop.f32.mrf.mxu0
    %v1130 = vadd.f32 0.0, %v1129
    %1131 = vmatmul.bf16.gmra.mxu0 %v611
    %v1132 = vpop.f32.mrf.mxu0
    %v1133 = vadd.f32 0.0, %v1132
    %v1134 = vpop.f32.mrf.mxu0
    %v1135 = vadd.f32 0.0, %v1134
    %1136 = vmatmul.bf16.gmra.mxu0 %v612
    %v1137 = vpop.f32.mrf.mxu0
    %v1138 = vadd.f32 0.0, %v1137
    %v1139 = vpop.f32.mrf.mxu0
    %v1140 = vadd.f32 0.0, %v1139
    %1141 = vmatmul.bf16.gmra.mxu0 %v613
    %v1142 = vpop.f32.mrf.mxu0
    %v1143 = vadd.f32 0.0, %v1142
    %v1144 = vpop.f32.mrf.mxu0
    %v1145 = vadd.f32 0.0, %v1144
    %1146 = vmatmul.bf16.gmra.mxu0 %v614
    %v1147 = vpop.f32.mrf.mxu0
    %v1148 = vadd.f32 0.0, %v1147
    %v1149 = vpop.f32.mrf.mxu0
    %v1150 = vadd.f32 0.0, %v1149
    %1151 = vmatmul.bf16.gmra.mxu0 %v615
    %v1152 = vpop.f32.mrf.mxu0
    %v1153 = vadd.f32 0.0, %v1152
    %v1154 = vpop.f32.mrf.mxu0
    %v1155 = vadd.f32 0.0, %v1154
    %1156 = vmatmul.bf16.gmra.mxu0 %v616
    %v1157 = vpop.f32.mrf.mxu0
    %v1158 = vadd.f32 0.0, %v1157
    %v1159 = vpop.f32.mrf.mxu0
    %v1160 = vadd.f32 0.0, %v1159
    %1161 = vmatmul.bf16.gmra.mxu0 %v617
    %v1162 = vpop.f32.mrf.mxu0
    %v1163 = vadd.f32 0.0, %v1162
    %v1164 = vpop.f32.mrf.mxu0
    %v1165 = vadd.f32 0.0, %v1164
    %1166 = vmatmul.bf16.gmra.mxu0 %v618
    %v1167 = vpop.f32.mrf.mxu0
    %v1168 = vadd.f32 0.0, %v1167
    %v1169 = vpop.f32.mrf.mxu0
    %v1170 = vadd.f32 0.0, %v1169
    %1171 = vmatmul.bf16.gmra.mxu0 %v619
    %v1172 = vpop.f32.mrf.mxu0
    %v1173 = vadd.f32 0.0, %v1172
    %v1174 = vpop.f32.mrf.mxu0
    %v1175 = vadd.f32 0.0, %v1174
    %1176 = vmatmul.bf16.gmra.mxu0 %v620
    %v1177 = vpop.f32.mrf.mxu0
    %v1178 = vadd.f32 0.0, %v1177
    %v1179 = vpop.f32.mrf.mxu0
    %v1180 = vadd.f32 0.0, %v1179
    %1181 = vmatmul.bf16.gmra.mxu0 %v621
    %v1182 = vpop.f32.mrf.mxu0
    %v1183 = vadd.f32 0.0, %v1182
    %v1184 = vpop.f32.mrf.mxu0
    %v1185 = vadd.f32 0.0, %v1184
    %1186 = vmatmul.bf16.gmra.mxu0 %v622
    %v1187 = vpop.f32.mrf.mxu0
    %v1188 = vadd.f32 0.0, %v1187
    %v1189 = vpop.f32.mrf.mxu0
    %v1190 = vadd.f32 0.0, %v1189
    %1191 = vmatmul.bf16.gmra.mxu0 %v623
    %v1192 = vpop.f32.mrf.mxu0
    %v1193 = vadd.f32 0.0, %v1192
    %v1194 = vpop.f32.mrf.mxu0
    %v1195 = vadd.f32 0.0, %v1194
    %1196 = vmatmul.bf16.gmra.mxu0 %v624
    %v1197 = vpop.f32.mrf.mxu0
    %v1198 = vadd.f32 0.0, %v1197
    %v1199 = vpop.f32.mrf.mxu0
    %v1200 = vadd.f32 0.0, %v1199
    %1201 = vmatmul.bf16.gmra.mxu0 %v625
    %v1202 = vpop.f32.mrf.mxu0
    %v1203 = vadd.f32 0.0, %v1202
    %v1204 = vpop.f32.mrf.mxu0
    %v1205 = vadd.f32 0.0, %v1204
    %1206 = vdwg.mxu0
    %1207 = vmatpush.bf16.msra.mxu0 %v1101
    %1208 = vmatpush.bf16.msra.mxu0 %v1099
    %1209 = vmatpush.bf16.msra.mxu0 %v1097
    %1210 = vmatpush.bf16.msra.mxu0 %v1095
    %1211 = vmatpush.bf16.msra.mxu0 %v1093
    %1212 = vmatpush.bf16.msra.mxu0 %v1091
    %1213 = vmatpush.bf16.msra.mxu0 %v1089
    %1214 = vmatpush.bf16.msra.mxu0 %v1087
    %1215 = vmatmul.bf16.gmra.mxu0 %v610
    %v1216 = vpop.f32.mrf.mxu0
    %v1217 = vadd.f32 0.0, %v1216
    %v1218 = vpop.f32.mrf.mxu0
    %v1219 = vadd.f32 0.0, %v1218
    %1220 = vmatmul.bf16.gmra.mxu0 %v611
    %v1221 = vpop.f32.mrf.mxu0
    %v1222 = vadd.f32 0.0, %v1221
    %v1223 = vpop.f32.mrf.mxu0
    %v1224 = vadd.f32 0.0, %v1223
    %1225 = vmatmul.bf16.gmra.mxu0 %v612
    %v1226 = vpop.f32.mrf.mxu0
    %v1227 = vadd.f32 0.0, %v1226
    %v1228 = vpop.f32.mrf.mxu0
    %v1229 = vadd.f32 0.0, %v1228
    %1230 = vmatmul.bf16.gmra.mxu0 %v613
    %v1231 = vpop.f32.mrf.mxu0
    %v1232 = vadd.f32 0.0, %v1231
    %v1233 = vpop.f32.mrf.mxu0
    %v1234 = vadd.f32 0.0, %v1233
    %1235 = vmatmul.bf16.gmra.mxu0 %v614
    %v1236 = vpop.f32.mrf.mxu0
    %v1237 = vadd.f32 0.0, %v1236
    %v1238 = vpop.f32.mrf.mxu0
    %v1239 = vadd.f32 0.0, %v1238
    %1240 = vmatmul.bf16.gmra.mxu0 %v615
    %v1241 = vpop.f32.mrf.mxu0
    %v1242 = vadd.f32 0.0, %v1241
    %v1243 = vpop.f32.mrf.mxu0
    %v1244 = vadd.f32 0.0, %v1243
    %1245 = vmatmul.bf16.gmra.mxu0 %v616
    %v1246 = vpop.f32.mrf.mxu0
    %v1247 = vadd.f32 0.0, %v1246
    %v1248 = vpop.f32.mrf.mxu0
    %v1249 = vadd.f32 0.0, %v1248
    %1250 = vmatmul.bf16.gmra.mxu0 %v617
    %v1251 = vpop.f32.mrf.mxu0
    %v1252 = vadd.f32 0.0, %v1251
    %v1253 = vpop.f32.mrf.mxu0
    %v1254 = vadd.f32 0.0, %v1253
    %1255 = vmatmul.bf16.gmra.mxu0 %v618
    %v1256 = vpop.f32.mrf.mxu0
    %v1257 = vadd.f32 0.0, %v1256
    %v1258 = vpop.f32.mrf.mxu0
    %v1259 = vadd.f32 0.0, %v1258
    %1260 = vmatmul.bf16.gmra.mxu0 %v619
    %v1261 = vpop.f32.mrf.mxu0
    %v1262 = vadd.f32 0.0, %v1261
    %v1263 = vpop.f32.mrf.mxu0
    %v1264 = vadd.f32 0.0, %v1263
    %1265 = vmatmul.bf16.gmra.mxu0 %v620
    %v1266 = vpop.f32.mrf.mxu0
    %v1267 = vadd.f32 0.0, %v1266
    %v1268 = vpop.f32.mrf.mxu0
    %v1269 = vadd.f32 0.0, %v1268
    %1270 = vmatmul.bf16.gmra.mxu0 %v621
    %v1271 = vpop.f32.mrf.mxu0
    %v1272 = vadd.f32 0.0, %v1271
    %v1273 = vpop.f32.mrf.mxu0
    %v1274 = vadd.f32 0.0, %v1273
    %1275 = vmatmul.bf16.gmra.mxu0 %v622
    %v1276 = vpop.f32.mrf.mxu0
    %v1277 = vadd.f32 0.0, %v1276
    %v1278 = vpop.f32.mrf.mxu0
    %v1279 = vadd.f32 0.0, %v1278
    %1280 = vmatmul.bf16.gmra.mxu0 %v623
    %v1281 = vpop.f32.mrf.mxu0
    %v1282 = vadd.f32 0.0, %v1281
    %v1283 = vpop.f32.mrf.mxu0
    %v1284 = vadd.f32 0.0, %v1283
    %1285 = vmatmul.bf16.gmra.mxu0 %v624
    %v1286 = vpop.f32.mrf.mxu0
    %v1287 = vadd.f32 0.0, %v1286
    %v1288 = vpop.f32.mrf.mxu0
    %v1289 = vadd.f32 0.0, %v1288
    %1290 = vmatmul.bf16.gmra.mxu0 %v625
    %v1291 = vpop.f32.mrf.mxu0
    %v1292 = vadd.f32 0.0, %v1291
    %v1293 = vpop.f32.mrf.mxu0
    %v1294 = vadd.f32 0.0, %v1293
    %1295 = vdwg.mxu0
    %v1296 = vmax.f32 %v1128, %v1130
    %v1297 = vmax.f32 %v1296, %v1133
    %v1298 = vmax.f32 %v1297, %v1135
    %v1299 = vmax.f32 %v1298, %v1138
    %v1300 = vmax.f32 %v1299, %v1140
    %v1301 = vmax.f32 %v1300, %v1143
    %v1302 = vmax.f32 %v1301, %v1145
    %v1303 = vmax.f32 %v1302, %v1148
    %v1304 = vmax.f32 %v1303, %v1150
    %v1305 = vmax.f32 %v1304, %v1153
    %v1306 = vmax.f32 %v1305, %v1155
    %v1307 = vmax.f32 %v1306, %v1158
    %v1308 = vmax.f32 %v1307, %v1160
    %v1309 = vmax.f32 %v1308, %v1163
    %v1310 = vmax.f32 %v1309, %v1165
    %v1311 = vrot.slane %v1310, 4
    %v1312 = vmax.f32 %v1310, %v1311
    %v1313 = vrot.slane %v1312, 2
    %v1314 = vmax.f32 %v1312, %v1313
    %v1315 = vrot.slane %v1314, 1
    %v1316 = vmax.f32 %v1314, %v1315
    %v1317 = vmax.f32 %v1217, %v1219
    %v1318 = vmax.f32 %v1317, %v1222
    %v1319 = vmax.f32 %v1318, %v1224
    %v1320 = vmax.f32 %v1319, %v1227
    %v1321 = vmax.f32 %v1320, %v1229
    %v1322 = vmax.f32 %v1321, %v1232
    %v1323 = vmax.f32 %v1322, %v1234
    %v1324 = vmax.f32 %v1323, %v1237
    %v1325 = vmax.f32 %v1324, %v1239
    %v1326 = vmax.f32 %v1325, %v1242
    %v1327 = vmax.f32 %v1326, %v1244
    %v1328 = vmax.f32 %v1327, %v1247
    %v1329 = vmax.f32 %v1328, %v1249
    %v1330 = vmax.f32 %v1329, %v1252
    %v1331 = vmax.f32 %v1330, %v1254
    %v1332 = vrot.slane %v1331, 4
    %v1333 = vmax.f32 %v1331, %v1332
    %v1334 = vrot.slane %v1333, 2
    %v1335 = vmax.f32 %v1333, %v1334
    %v1336 = vrot.slane %v1335, 1
    %v1337 = vmax.f32 %v1335, %v1336
    %v1338 = vmax.f32 %v1168, %v1170
    %v1339 = vmax.f32 %v1338, %v1173
    %v1340 = vmax.f32 %v1339, %v1175
    %v1341 = vmax.f32 %v1340, %v1178
    %v1342 = vmax.f32 %v1341, %v1180
    %v1343 = vmax.f32 %v1342, %v1183
    %v1344 = vmax.f32 %v1343, %v1185
    %v1345 = vmax.f32 %v1344, %v1188
    %v1346 = vmax.f32 %v1345, %v1190
    %v1347 = vmax.f32 %v1346, %v1193
    %v1348 = vmax.f32 %v1347, %v1195
    %v1349 = vmax.f32 %v1348, %v1198
    %v1350 = vmax.f32 %v1349, %v1200
    %v1351 = vmax.f32 %v1350, %v1203
    %v1352 = vmax.f32 %v1351, %v1205
    %v1353 = vrot.slane %v1352, 4
    %v1354 = vmax.f32 %v1352, %v1353
    %v1355 = vrot.slane %v1354, 2
    %v1356 = vmax.f32 %v1354, %v1355
    %v1357 = vrot.slane %v1356, 1
    %v1358 = vmax.f32 %v1356, %v1357
    %v1359 = vmax.f32 %v1257, %v1259
    %v1360 = vmax.f32 %v1359, %v1262
    %v1361 = vmax.f32 %v1360, %v1264
    %v1362 = vmax.f32 %v1361, %v1267
    %v1363 = vmax.f32 %v1362, %v1269
    %v1364 = vmax.f32 %v1363, %v1272
    %v1365 = vmax.f32 %v1364, %v1274
    %v1366 = vmax.f32 %v1365, %v1277
    %v1367 = vmax.f32 %v1366, %v1279
    %v1368 = vmax.f32 %v1367, %v1282
    %v1369 = vmax.f32 %v1368, %v1284
    %v1370 = vmax.f32 %v1369, %v1287
    %v1371 = vmax.f32 %v1370, %v1289
    %v1372 = vmax.f32 %v1371, %v1292
    %v1373 = vmax.f32 %v1372, %v1294
    %v1374 = vrot.slane %v1373, 4
    %v1375 = vmax.f32 %v1373, %v1374
    %v1376 = vrot.slane %v1375, 2
    %v1377 = vmax.f32 %v1375, %v1376
    %v1378 = vrot.slane %v1377, 1
    %v1379 = vmax.f32 %v1377, %v1378
    %v1380 = vld [vmem:[%s6 + $0x2] sm:$0x3]
    %v1382 = vperm.slane %v1380, 0
    %v1383 = vperm.slane %v1380, 1
    %v1386 = vadd.f32 %v1316, %v1382
    %v1387 = vadd.f32 %v1337, %v1383
    %v1388 = vadd.f32 %v1358, %v1382
    %v1389 = vadd.f32 %v1379, %v1383
    %v1390 = vmax.f32 %v1386, 0.0
    %v1391 = vmax.f32 %v1387, 0.0
    %v1392 = vmax.f32 %v1388, 0.0
    %v1393 = vmax.f32 %v1389, 0.0
    %v1398 = vrot.slane %v1391, 6
    %v1399 = vrot.slane %v1393, 6
    %v1400 = vsel %vm1004, %v1390, %v1398
    %v1401 = vsel %vm1004, %v1392, %v1399
    %v1402 = vsel %vm1007, %v1400, %v1400
    %v1403 = vsel %vm1009, %v1400, %v1402
    %v1404 = vrot.slane %v1401, 7
    %v1405 = vsel %vm1012, %v1404, %v1403
    %v1406 = vsel %vm1014, %v1404, %v1405
    %v1407 = vsel %vm1016, %v1404, %v1406
    %v1408 = vsel %vm1018, %v1404, %v1407
    %1410 = vst [vmem:[#allocation5 + $0x4] sm:$0xf] %v1408
    %v1411 = vld [vmem:[#allocation2 + $0x10] sm:$0xff]
    %v1412 = vld [vmem:[#allocation2 + $0x30] sm:$0xff]
    %v1413 = vld [vmem:[#allocation2 + $0x50] sm:$0xff]
    %v1414 = vld [vmem:[#allocation2 + $0x70] sm:$0xff]
    %v1415 = vld [vmem:[#allocation2 + $0x90] sm:$0xff]
    %v1416 = vld [vmem:[#allocation2 + $0xb0] sm:$0xff]
    %v1417 = vld [vmem:[#allocation2 + $0xd0] sm:$0xff]
    %v1418 = vld [vmem:[#allocation2 + $0xf0] sm:$0xff]
    %v1419 = vld [vmem:[#allocation2 + $0x110] sm:$0xff]
    %v1420 = vld [vmem:[#allocation2 + $0x130] sm:$0xff]
    %v1421 = vld [vmem:[#allocation2 + $0x150] sm:$0xff]
    %v1422 = vld [vmem:[#allocation2 + $0x170] sm:$0xff]
    %v1423 = vld [vmem:[#allocation2 + $0x190] sm:$0xff]
    %v1424 = vld [vmem:[#allocation2 + $0x1b0] sm:$0xff]
    %v1425 = vld [vmem:[#allocation2 + $0x1d0] sm:$0xff]
    %v1426 = vld [vmem:[#allocation2 + $0x1f0] sm:$0xff]
    %v1443 = vunpack.c.l.b16 %v1411
    %v1444 = vunpack.c.h.b16 %v1411
    %v1445 = vunpack.c.l.b16 %v1412
    %v1446 = vunpack.c.h.b16 %v1412
    %v1447 = vunpack.c.l.b16 %v1413
    %v1448 = vunpack.c.h.b16 %v1413
    %v1449 = vunpack.c.l.b16 %v1414
    %v1450 = vunpack.c.h.b16 %v1414
    %v1451 = vunpack.c.l.b16 %v1415
    %v1452 = vunpack.c.h.b16 %v1415
    %v1453 = vunpack.c.l.b16 %v1416
    %v1454 = vunpack.c.h.b16 %v1416
    %v1455 = vunpack.c.l.b16 %v1417
    %v1456 = vunpack.c.h.b16 %v1417
    %v1457 = vunpack.c.l.b16 %v1418
    %v1458 = vunpack.c.h.b16 %v1418
    %v1459 = vunpack.c.l.b16 %v1419
    %v1460 = vunpack.c.h.b16 %v1419
    %v1461 = vunpack.c.l.b16 %v1420
    %v1462 = vunpack.c.h.b16 %v1420
    %v1463 = vunpack.c.l.b16 %v1421
    %v1464 = vunpack.c.h.b16 %v1421
    %v1465 = vunpack.c.l.b16 %v1422
    %v1466 = vunpack.c.h.b16 %v1422
    %v1467 = vunpack.c.l.b16 %v1423
    %v1468 = vunpack.c.h.b16 %v1423
    %v1469 = vunpack.c.l.b16 %v1424
    %v1470 = vunpack.c.h.b16 %v1424
    %v1471 = vunpack.c.l.b16 %v1425
    %v1472 = vunpack.c.h.b16 %v1425
    %v1473 = vunpack.c.l.b16 %v1426
    %v1474 = vunpack.c.h.b16 %v1426
    %v1475 = vpack.c.b16 %v1445, %v1443
    %v1476 = vpack.c.b16 %v1446, %v1444
    %v1477 = vpack.c.b16 %v1449, %v1447
    %v1478 = vpack.c.b16 %v1450, %v1448
    %v1479 = vpack.c.b16 %v1453, %v1451
    %v1480 = vpack.c.b16 %v1454, %v1452
    %v1481 = vpack.c.b16 %v1457, %v1455
    %v1482 = vpack.c.b16 %v1458, %v1456
    %v1483 = vpack.c.b16 %v1461, %v1459
    %v1484 = vpack.c.b16 %v1462, %v1460
    %v1485 = vpack.c.b16 %v1465, %v1463
    %v1486 = vpack.c.b16 %v1466, %v1464
    %v1487 = vpack.c.b16 %v1469, %v1467
    %v1488 = vpack.c.b16 %v1470, %v1468
    %v1489 = vpack.c.b16 %v1473, %v1471
    %v1490 = vpack.c.b16 %v1474, %v1472
    %1507 = vmatpush.bf16.msra.mxu0 %v1489
    %1508 = vmatpush.bf16.msra.mxu0 %v1487
    %1509 = vmatpush.bf16.msra.mxu0 %v1485
    %1510 = vmatpush.bf16.msra.mxu0 %v1483
    %1511 = vmatpush.bf16.msra.mxu0 %v1481
    %1512 = vmatpush.bf16.msra.mxu0 %v1479
    %1513 = vmatpush.bf16.msra.mxu0 %v1477
    %1514 = vmatpush.bf16.msra.mxu0 %v1475
    %1515 = vmatmul.bf16.gmra.mxu0 %v610
    %v1516 = vpop.f32.mrf.mxu0
    %v1517 = vadd.f32 0.0, %v1516
    %v1518 = vpop.f32.mrf.mxu0
    %v1519 = vadd.f32 0.0, %v1518
    %1520 = vmatmul.bf16.gmra.mxu0 %v611
    %v1521 = vpop.f32.mrf.mxu0
    %v1522 = vadd.f32 0.0, %v1521
    %v1523 = vpop.f32.mrf.mxu0
    %v1524 = vadd.f32 0.0, %v1523
    %1525 = vmatmul.bf16.gmra.mxu0 %v612
    %v1526 = vpop.f32.mrf.mxu0
    %v1527 = vadd.f32 0.0, %v1526
    %v1528 = vpop.f32.mrf.mxu0
    %v1529 = vadd.f32 0.0, %v1528
    %1530 = vmatmul.bf16.gmra.mxu0 %v613
    %v1531 = vpop.f32.mrf.mxu0
    %v1532 = vadd.f32 0.0, %v1531
    %v1533 = vpop.f32.mrf.mxu0
    %v1534 = vadd.f32 0.0, %v1533
    %1535 = vmatmul.bf16.gmra.mxu0 %v614
    %v1536 = vpop.f32.mrf.mxu0
    %v1537 = vadd.f32 0.0, %v1536
    %v1538 = vpop.f32.mrf.mxu0
    %v1539 = vadd.f32 0.0, %v1538
    %1540 = vmatmul.bf16.gmra.mxu0 %v615
    %v1541 = vpop.f32.mrf.mxu0
    %v1542 = vadd.f32 0.0, %v1541
    %v1543 = vpop.f32.mrf.mxu0
    %v1544 = vadd.f32 0.0, %v1543
    %1545 = vmatmul.bf16.gmra.mxu0 %v616
    %v1546 = vpop.f32.mrf.mxu0
    %v1547 = vadd.f32 0.0, %v1546
    %v1548 = vpop.f32.mrf.mxu0
    %v1549 = vadd.f32 0.0, %v1548
    %1550 = vmatmul.bf16.gmra.mxu0 %v617
    %v1551 = vpop.f32.mrf.mxu0
    %v1552 = vadd.f32 0.0, %v1551
    %v1553 = vpop.f32.mrf.mxu0
    %v1554 = vadd.f32 0.0, %v1553
    %1555 = vmatmul.bf16.gmra.mxu0 %v618
    %v1556 = vpop.f32.mrf.mxu0
    %v1557 = vadd.f32 0.0, %v1556
    %v1558 = vpop.f32.mrf.mxu0
    %v1559 = vadd.f32 0.0, %v1558
    %1560 = vmatmul.bf16.gmra.mxu0 %v619
    %v1561 = vpop.f32.mrf.mxu0
    %v1562 = vadd.f32 0.0, %v1561
    %v1563 = vpop.f32.mrf.mxu0
    %v1564 = vadd.f32 0.0, %v1563
    %1565 = vmatmul.bf16.gmra.mxu0 %v620
    %v1566 = vpop.f32.mrf.mxu0
    %v1567 = vadd.f32 0.0, %v1566
    %v1568 = vpop.f32.mrf.mxu0
    %v1569 = vadd.f32 0.0, %v1568
    %1570 = vmatmul.bf16.gmra.mxu0 %v621
    %v1571 = vpop.f32.mrf.mxu0
    %v1572 = vadd.f32 0.0, %v1571
    %v1573 = vpop.f32.mrf.mxu0
    %v1574 = vadd.f32 0.0, %v1573
    %1575 = vmatmul.bf16.gmra.mxu0 %v622
    %v1576 = vpop.f32.mrf.mxu0
    %v1577 = vadd.f32 0.0, %v1576
    %v1578 = vpop.f32.mrf.mxu0
    %v1579 = vadd.f32 0.0, %v1578
    %1580 = vmatmul.bf16.gmra.mxu0 %v623
    %v1581 = vpop.f32.mrf.mxu0
    %v1582 = vadd.f32 0.0, %v1581
    %v1583 = vpop.f32.mrf.mxu0
    %v1584 = vadd.f32 0.0, %v1583
    %1585 = vmatmul.bf16.gmra.mxu0 %v624
    %v1586 = vpop.f32.mrf.mxu0
    %v1587 = vadd.f32 0.0, %v1586
    %v1588 = vpop.f32.mrf.mxu0
    %v1589 = vadd.f32 0.0, %v1588
    %1590 = vmatmul.bf16.gmra.mxu0 %v625
    %v1591 = vpop.f32.mrf.mxu0
    %v1592 = vadd.f32 0.0, %v1591
    %v1593 = vpop.f32.mrf.mxu0
    %v1594 = vadd.f32 0.0, %v1593
    %1595 = vdwg.mxu0
    %1596 = vmatpush.bf16.msra.mxu0 %v1490
    %1597 = vmatpush.bf16.msra.mxu0 %v1488
    %1598 = vmatpush.bf16.msra.mxu0 %v1486
    %1599 = vmatpush.bf16.msra.mxu0 %v1484
    %1600 = vmatpush.bf16.msra.mxu0 %v1482
    %1601 = vmatpush.bf16.msra.mxu0 %v1480
    %1602 = vmatpush.bf16.msra.mxu0 %v1478
    %1603 = vmatpush.bf16.msra.mxu0 %v1476
    %1604 = vmatmul.bf16.gmra.mxu0 %v610
    %v1605 = vpop.f32.mrf.mxu0
    %v1606 = vadd.f32 0.0, %v1605
    %v1607 = vpop.f32.mrf.mxu0
    %v1608 = vadd.f32 0.0, %v1607
    %1609 = vmatmul.bf16.gmra.mxu0 %v611
    %v1610 = vpop.f32.mrf.mxu0
    %v1611 = vadd.f32 0.0, %v1610
    %v1612 = vpop.f32.mrf.mxu0
    %v1613 = vadd.f32 0.0, %v1612
    %1614 = vmatmul.bf16.gmra.mxu0 %v612
    %v1615 = vpop.f32.mrf.mxu0
    %v1616 = vadd.f32 0.0, %v1615
    %v1617 = vpop.f32.mrf.mxu0
    %v1618 = vadd.f32 0.0, %v1617
    %1619 = vmatmul.bf16.gmra.mxu0 %v613
    %v1620 = vpop.f32.mrf.mxu0
    %v1621 = vadd.f32 0.0, %v1620
    %v1622 = vpop.f32.mrf.mxu0
    %v1623 = vadd.f32 0.0, %v1622
    %1624 = vmatmul.bf16.gmra.mxu0 %v614
    %v1625 = vpop.f32.mrf.mxu0
    %v1626 = vadd.f32 0.0, %v1625
    %v1627 = vpop.f32.mrf.mxu0
    %v1628 = vadd.f32 0.0, %v1627
    %1629 = vmatmul.bf16.gmra.mxu0 %v615
    %v1630 = vpop.f32.mrf.mxu0
    %v1631 = vadd.f32 0.0, %v1630
    %v1632 = vpop.f32.mrf.mxu0
    %v1633 = vadd.f32 0.0, %v1632
    %1634 = vmatmul.bf16.gmra.mxu0 %v616
    %v1635 = vpop.f32.mrf.mxu0
    %v1636 = vadd.f32 0.0, %v1635
    %v1637 = vpop.f32.mrf.mxu0
    %v1638 = vadd.f32 0.0, %v1637
    %1639 = vmatmul.bf16.gmra.mxu0 %v617
    %v1640 = vpop.f32.mrf.mxu0
    %v1641 = vadd.f32 0.0, %v1640
    %v1642 = vpop.f32.mrf.mxu0
    %v1643 = vadd.f32 0.0, %v1642
    %1644 = vmatmul.bf16.gmra.mxu0 %v618
    %v1645 = vpop.f32.mrf.mxu0
    %v1646 = vadd.f32 0.0, %v1645
    %v1647 = vpop.f32.mrf.mxu0
    %v1648 = vadd.f32 0.0, %v1647
    %1649 = vmatmul.bf16.gmra.mxu0 %v619
    %v1650 = vpop.f32.mrf.mxu0
    %v1651 = vadd.f32 0.0, %v1650
    %v1652 = vpop.f32.mrf.mxu0
    %v1653 = vadd.f32 0.0, %v1652
    %1654 = vmatmul.bf16.gmra.mxu0 %v620
    %v1655 = vpop.f32.mrf.mxu0
    %v1656 = vadd.f32 0.0, %v1655
    %v1657 = vpop.f32.mrf.mxu0
    %v1658 = vadd.f32 0.0, %v1657
    %1659 = vmatmul.bf16.gmra.mxu0 %v621
    %v1660 = vpop.f32.mrf.mxu0
    %v1661 = vadd.f32 0.0, %v1660
    %v1662 = vpop.f32.mrf.mxu0
    %v1663 = vadd.f32 0.0, %v1662
    %1664 = vmatmul.bf16.gmra.mxu0 %v622
    %v1665 = vpop.f32.mrf.mxu0
    %v1666 = vadd.f32 0.0, %v1665
    %v1667 = vpop.f32.mrf.mxu0
    %v1668 = vadd.f32 0.0, %v1667
    %1669 = vmatmul.bf16.gmra.mxu0 %v623
    %v1670 = vpop.f32.mrf.mxu0
    %v1671 = vadd.f32 0.0, %v1670
    %v1672 = vpop.f32.mrf.mxu0
    %v1673 = vadd.f32 0.0, %v1672
    %1674 = vmatmul.bf16.gmra.mxu0 %v624
    %v1675 = vpop.f32.mrf.mxu0
    %v1676 = vadd.f32 0.0, %v1675
    %v1677 = vpop.f32.mrf.mxu0
    %v1678 = vadd.f32 0.0, %v1677
    %1679 = vmatmul.bf16.gmra.mxu0 %v625
    %v1680 = vpop.f32.mrf.mxu0
    %v1681 = vadd.f32 0.0, %v1680
    %v1682 = vpop.f32.mrf.mxu0
    %v1683 = vadd.f32 0.0, %v1682
    %1684 = vdwg.mxu0
    %v1685 = vmax.f32 %v1517, %v1519
    %v1686 = vmax.f32 %v1685, %v1522
    %v1687 = vmax.f32 %v1686, %v1524
    %v1688 = vmax.f32 %v1687, %v1527
    %v1689 = vmax.f32 %v1688, %v1529
    %v1690 = vmax.f32 %v1689, %v1532
    %v1691 = vmax.f32 %v1690, %v1534
    %v1692 = vmax.f32 %v1691, %v1537
    %v1693 = vmax.f32 %v1692, %v1539
    %v1694 = vmax.f32 %v1693, %v1542
    %v1695 = vmax.f32 %v1694, %v1544
    %v1696 = vmax.f32 %v1695, %v1547
    %v1697 = vmax.f32 %v1696, %v1549
    %v1698 = vmax.f32 %v1697, %v1552
    %v1699 = vmax.f32 %v1698, %v1554
    %v1700 = vrot.slane %v1699, 4
    %v1701 = vmax.f32 %v1699, %v1700
    %v1702 = vrot.slane %v1701, 2
    %v1703 = vmax.f32 %v1701, %v1702
    %v1704 = vrot.slane %v1703, 1
    %v1705 = vmax.f32 %v1703, %v1704
    %v1706 = vmax.f32 %v1606, %v1608
    %v1707 = vmax.f32 %v1706, %v1611
    %v1708 = vmax.f32 %v1707, %v1613
    %v1709 = vmax.f32 %v1708, %v1616
    %v1710 = vmax.f32 %v1709, %v1618
    %v1711 = vmax.f32 %v1710, %v1621
    %v1712 = vmax.f32 %v1711, %v1623
    %v1713 = vmax.f32 %v1712, %v1626
    %v1714 = vmax.f32 %v1713, %v1628
    %v1715 = vmax.f32 %v1714, %v1631
    %v1716 = vmax.f32 %v1715, %v1633
    %v1717 = vmax.f32 %v1716, %v1636
    %v1718 = vmax.f32 %v1717, %v1638
    %v1719 = vmax.f32 %v1718, %v1641
    %v1720 = vmax.f32 %v1719, %v1643
    %v1721 = vrot.slane %v1720, 4
    %v1722 = vmax.f32 %v1720, %v1721
    %v1723 = vrot.slane %v1722, 2
    %v1724 = vmax.f32 %v1722, %v1723
    %v1725 = vrot.slane %v1724, 1
    %v1726 = vmax.f32 %v1724, %v1725
    %v1727 = vmax.f32 %v1557, %v1559
    %v1728 = vmax.f32 %v1727, %v1562
    %v1729 = vmax.f32 %v1728, %v1564
    %v1730 = vmax.f32 %v1729, %v1567
    %v1731 = vmax.f32 %v1730, %v1569
    %v1732 = vmax.f32 %v1731, %v1572
    %v1733 = vmax.f32 %v1732, %v1574
    %v1734 = vmax.f32 %v1733, %v1577
    %v1735 = vmax.f32 %v1734, %v1579
    %v1736 = vmax.f32 %v1735, %v1582
    %v1737 = vmax.f32 %v1736, %v1584
    %v1738 = vmax.f32 %v1737, %v1587
    %v1739 = vmax.f32 %v1738, %v1589
    %v1740 = vmax.f32 %v1739, %v1592
    %v1741 = vmax.f32 %v1740, %v1594
    %v1742 = vrot.slane %v1741, 4
    %v1743 = vmax.f32 %v1741, %v1742
    %v1744 = vrot.slane %v1743, 2
    %v1745 = vmax.f32 %v1743, %v1744
    %v1746 = vrot.slane %v1745, 1
    %v1747 = vmax.f32 %v1745, %v1746
    %v1748 = vmax.f32 %v1646, %v1648
    %v1749 = vmax.f32 %v1748, %v1651
    %v1750 = vmax.f32 %v1749, %v1653
    %v1751 = vmax.f32 %v1750, %v1656
    %v1752 = vmax.f32 %v1751, %v1658
    %v1753 = vmax.f32 %v1752, %v1661
    %v1754 = vmax.f32 %v1753, %v1663
    %v1755 = vmax.f32 %v1754, %v1666
    %v1756 = vmax.f32 %v1755, %v1668
    %v1757 = vmax.f32 %v1756, %v1671
    %v1758 = vmax.f32 %v1757, %v1673
    %v1759 = vmax.f32 %v1758, %v1676
    %v1760 = vmax.f32 %v1759, %v1678
    %v1761 = vmax.f32 %v1760, %v1681
    %v1762 = vmax.f32 %v1761, %v1683
    %v1763 = vrot.slane %v1762, 4
    %v1764 = vmax.f32 %v1762, %v1763
    %v1765 = vrot.slane %v1764, 2
    %v1766 = vmax.f32 %v1764, %v1765
    %v1767 = vrot.slane %v1766, 1
    %v1768 = vmax.f32 %v1766, %v1767
    %v1769 = vld [vmem:[%s6 + $0x4] sm:$0x3]
    %v1771 = vperm.slane %v1769, 0
    %v1772 = vperm.slane %v1769, 1
    %v1775 = vadd.f32 %v1705, %v1771
    %v1776 = vadd.f32 %v1726, %v1772
    %v1777 = vadd.f32 %v1747, %v1771
    %v1778 = vadd.f32 %v1768, %v1772
    %v1779 = vmax.f32 %v1775, 0.0
    %v1780 = vmax.f32 %v1776, 0.0
    %v1781 = vmax.f32 %v1777, 0.0
    %v1782 = vmax.f32 %v1778, 0.0
    %v1787 = vrot.slane %v1780, 6
    %v1788 = vrot.slane %v1782, 6
    %v1789 = vsel %vm1004, %v1779, %v1787
    %v1790 = vsel %vm1004, %v1781, %v1788
    %v1791 = vsel %vm1007, %v1789, %v1789
    %v1792 = vsel %vm1009, %v1789, %v1791
    %v1793 = vrot.slane %v1790, 7
    %v1794 = vsel %vm1012, %v1793, %v1792
    %v1795 = vsel %vm1014, %v1793, %v1794
    %v1796 = vsel %vm1016, %v1793, %v1795
    %v1797 = vsel %vm1018, %v1793, %v1796
    %1799 = vst [vmem:[#allocation5 + $0x8] sm:$0xf] %v1797
    %v1800 = vld [vmem:[#allocation2 + $0x18] sm:$0xff]
    %v1801 = vld [vmem:[#allocation2 + $0x38] sm:$0xff]
    %v1802 = vld [vmem:[#allocation2 + $0x58] sm:$0xff]
    %v1803 = vld [vmem:[#allocation2 + $0x78] sm:$0xff]
    %v1804 = vld [vmem:[#allocation2 + $0x98] sm:$0xff]
    %v1805 = vld [vmem:[#allocation2 + $0xb8] sm:$0xff]
    %v1806 = vld [vmem:[#allocation2 + $0xd8] sm:$0xff]
    %v1807 = vld [vmem:[#allocation2 + $0xf8] sm:$0xff]
    %v1808 = vld [vmem:[#allocation2 + $0x118] sm:$0xff]
    %v1809 = vld [vmem:[#allocation2 + $0x138] sm:$0xff]
    %v1810 = vld [vmem:[#allocation2 + $0x158] sm:$0xff]
    %v1811 = vld [vmem:[#allocation2 + $0x178] sm:$0xff]
    %v1812 = vld [vmem:[#allocation2 + $0x198] sm:$0xff]
    %v1813 = vld [vmem:[#allocation2 + $0x1b8] sm:$0xff]
    %v1814 = vld [vmem:[#allocation2 + $0x1d8] sm:$0xff]
    %v1815 = vld [vmem:[#allocation2 + $0x1f8] sm:$0xff]
    %v1832 = vunpack.c.l.b16 %v1800
    %v1833 = vunpack.c.h.b16 %v1800
    %v1834 = vunpack.c.l.b16 %v1801
    %v1835 = vunpack.c.h.b16 %v1801
    %v1836 = vunpack.c.l.b16 %v1802
    %v1837 = vunpack.c.h.b16 %v1802
    %v1838 = vunpack.c.l.b16 %v1803
    %v1839 = vunpack.c.h.b16 %v1803
    %v1840 = vunpack.c.l.b16 %v1804
    %v1841 = vunpack.c.h.b16 %v1804
    %v1842 = vunpack.c.l.b16 %v1805
    %v1843 = vunpack.c.h.b16 %v1805
    %v1844 = vunpack.c.l.b16 %v1806
    %v1845 = vunpack.c.h.b16 %v1806
    %v1846 = vunpack.c.l.b16 %v1807
    %v1847 = vunpack.c.h.b16 %v1807
    %v1848 = vunpack.c.l.b16 %v1808
    %v1849 = vunpack.c.h.b16 %v1808
    %v1850 = vunpack.c.l.b16 %v1809
    %v1851 = vunpack.c.h.b16 %v1809
    %v1852 = vunpack.c.l.b16 %v1810
    %v1853 = vunpack.c.h.b16 %v1810
    %v1854 = vunpack.c.l.b16 %v1811
    %v1855 = vunpack.c.h.b16 %v1811
    %v1856 = vunpack.c.l.b16 %v1812
    %v1857 = vunpack.c.h.b16 %v1812
    %v1858 = vunpack.c.l.b16 %v1813
    %v1859 = vunpack.c.h.b16 %v1813
    %v1860 = vunpack.c.l.b16 %v1814
    %v1861 = vunpack.c.h.b16 %v1814
    %v1862 = vunpack.c.l.b16 %v1815
    %v1863 = vunpack.c.h.b16 %v1815
    %v1864 = vpack.c.b16 %v1834, %v1832
    %v1865 = vpack.c.b16 %v1835, %v1833
    %v1866 = vpack.c.b16 %v1838, %v1836
    %v1867 = vpack.c.b16 %v1839, %v1837
    %v1868 = vpack.c.b16 %v1842, %v1840
    %v1869 = vpack.c.b16 %v1843, %v1841
    %v1870 = vpack.c.b16 %v1846, %v1844
    %v1871 = vpack.c.b16 %v1847, %v1845
    %v1872 = vpack.c.b16 %v1850, %v1848
    %v1873 = vpack.c.b16 %v1851, %v1849
    %v1874 = vpack.c.b16 %v1854, %v1852
    %v1875 = vpack.c.b16 %v1855, %v1853
    %v1876 = vpack.c.b16 %v1858, %v1856
    %v1877 = vpack.c.b16 %v1859, %v1857
    %v1878 = vpack.c.b16 %v1862, %v1860
    %v1879 = vpack.c.b16 %v1863, %v1861
    %1896 = vmatpush.bf16.msra.mxu0 %v1878
    %1897 = vmatpush.bf16.msra.mxu0 %v1876
    %1898 = vmatpush.bf16.msra.mxu0 %v1874
    %1899 = vmatpush.bf16.msra.mxu0 %v1872
    %1900 = vmatpush.bf16.msra.mxu0 %v1870
    %1901 = vmatpush.bf16.msra.mxu0 %v1868
    %1902 = vmatpush.bf16.msra.mxu0 %v1866
    %1903 = vmatpush.bf16.msra.mxu0 %v1864
    %1904 = vmatmul.bf16.gmra.mxu0 %v610
    %v1905 = vpop.f32.mrf.mxu0
    %v1906 = vadd.f32 0.0, %v1905
    %v1907 = vpop.f32.mrf.mxu0
    %v1908 = vadd.f32 0.0, %v1907
    %1909 = vmatmul.bf16.gmra.mxu0 %v611
    %v1910 = vpop.f32.mrf.mxu0
    %v1911 = vadd.f32 0.0, %v1910
    %v1912 = vpop.f32.mrf.mxu0
    %v1913 = vadd.f32 0.0, %v1912
    %1914 = vmatmul.bf16.gmra.mxu0 %v612
    %v1915 = vpop.f32.mrf.mxu0
    %v1916 = vadd.f32 0.0, %v1915
    %v1917 = vpop.f32.mrf.mxu0
    %v1918 = vadd.f32 0.0, %v1917
    %1919 = vmatmul.bf16.gmra.mxu0 %v613
    %v1920 = vpop.f32.mrf.mxu0
    %v1921 = vadd.f32 0.0, %v1920
    %v1922 = vpop.f32.mrf.mxu0
    %v1923 = vadd.f32 0.0, %v1922
    %1924 = vmatmul.bf16.gmra.mxu0 %v614
    %v1925 = vpop.f32.mrf.mxu0
    %v1926 = vadd.f32 0.0, %v1925
    %v1927 = vpop.f32.mrf.mxu0
    %v1928 = vadd.f32 0.0, %v1927
    %1929 = vmatmul.bf16.gmra.mxu0 %v615
    %v1930 = vpop.f32.mrf.mxu0
    %v1931 = vadd.f32 0.0, %v1930
    %v1932 = vpop.f32.mrf.mxu0
    %v1933 = vadd.f32 0.0, %v1932
    %1934 = vmatmul.bf16.gmra.mxu0 %v616
    %v1935 = vpop.f32.mrf.mxu0
    %v1936 = vadd.f32 0.0, %v1935
    %v1937 = vpop.f32.mrf.mxu0
    %v1938 = vadd.f32 0.0, %v1937
    %1939 = vmatmul.bf16.gmra.mxu0 %v617
    %v1940 = vpop.f32.mrf.mxu0
    %v1941 = vadd.f32 0.0, %v1940
    %v1942 = vpop.f32.mrf.mxu0
    %v1943 = vadd.f32 0.0, %v1942
    %1944 = vmatmul.bf16.gmra.mxu0 %v618
    %v1945 = vpop.f32.mrf.mxu0
    %v1946 = vadd.f32 0.0, %v1945
    %v1947 = vpop.f32.mrf.mxu0
    %v1948 = vadd.f32 0.0, %v1947
    %1949 = vmatmul.bf16.gmra.mxu0 %v619
    %v1950 = vpop.f32.mrf.mxu0
    %v1951 = vadd.f32 0.0, %v1950
    %v1952 = vpop.f32.mrf.mxu0
    %v1953 = vadd.f32 0.0, %v1952
    %1954 = vmatmul.bf16.gmra.mxu0 %v620
    %v1955 = vpop.f32.mrf.mxu0
    %v1956 = vadd.f32 0.0, %v1955
    %v1957 = vpop.f32.mrf.mxu0
    %v1958 = vadd.f32 0.0, %v1957
    %1959 = vmatmul.bf16.gmra.mxu0 %v621
    %v1960 = vpop.f32.mrf.mxu0
    %v1961 = vadd.f32 0.0, %v1960
    %v1962 = vpop.f32.mrf.mxu0
    %v1963 = vadd.f32 0.0, %v1962
    %1964 = vmatmul.bf16.gmra.mxu0 %v622
    %v1965 = vpop.f32.mrf.mxu0
    %v1966 = vadd.f32 0.0, %v1965
    %v1967 = vpop.f32.mrf.mxu0
    %v1968 = vadd.f32 0.0, %v1967
    %1969 = vmatmul.bf16.gmra.mxu0 %v623
    %v1970 = vpop.f32.mrf.mxu0
    %v1971 = vadd.f32 0.0, %v1970
    %v1972 = vpop.f32.mrf.mxu0
    %v1973 = vadd.f32 0.0, %v1972
    %1974 = vmatmul.bf16.gmra.mxu0 %v624
    %v1975 = vpop.f32.mrf.mxu0
    %v1976 = vadd.f32 0.0, %v1975
    %v1977 = vpop.f32.mrf.mxu0
    %v1978 = vadd.f32 0.0, %v1977
    %1979 = vmatmul.bf16.gmra.mxu0 %v625
    %v1980 = vpop.f32.mrf.mxu0
    %v1981 = vadd.f32 0.0, %v1980
    %v1982 = vpop.f32.mrf.mxu0
    %v1983 = vadd.f32 0.0, %v1982
    %1984 = vdwg.mxu0
    %1985 = vmatpush.bf16.msra.mxu0 %v1879
    %1986 = vmatpush.bf16.msra.mxu0 %v1877
    %1987 = vmatpush.bf16.msra.mxu0 %v1875
    %1988 = vmatpush.bf16.msra.mxu0 %v1873
    %1989 = vmatpush.bf16.msra.mxu0 %v1871
    %1990 = vmatpush.bf16.msra.mxu0 %v1869
    %1991 = vmatpush.bf16.msra.mxu0 %v1867
    %1992 = vmatpush.bf16.msra.mxu0 %v1865
    %1993 = vmatmul.bf16.gmra.mxu0 %v610
    %v1994 = vpop.f32.mrf.mxu0
    %v1995 = vadd.f32 0.0, %v1994
    %v1996 = vpop.f32.mrf.mxu0
    %v1997 = vadd.f32 0.0, %v1996
    %1998 = vmatmul.bf16.gmra.mxu0 %v611
    %v1999 = vpop.f32.mrf.mxu0
    %v2000 = vadd.f32 0.0, %v1999
    %v2001 = vpop.f32.mrf.mxu0
    %v2002 = vadd.f32 0.0, %v2001
    %2003 = vmatmul.bf16.gmra.mxu0 %v612
    %v2004 = vpop.f32.mrf.mxu0
    %v2005 = vadd.f32 0.0, %v2004
    %v2006 = vpop.f32.mrf.mxu0
    %v2007 = vadd.f32 0.0, %v2006
    %2008 = vmatmul.bf16.gmra.mxu0 %v613
    %v2009 = vpop.f32.mrf.mxu0
    %v2010 = vadd.f32 0.0, %v2009
    %v2011 = vpop.f32.mrf.mxu0
    %v2012 = vadd.f32 0.0, %v2011
    %2013 = vmatmul.bf16.gmra.mxu0 %v614
    %v2014 = vpop.f32.mrf.mxu0
    %v2015 = vadd.f32 0.0, %v2014
    %v2016 = vpop.f32.mrf.mxu0
    %v2017 = vadd.f32 0.0, %v2016
    %2018 = vmatmul.bf16.gmra.mxu0 %v615
    %v2019 = vpop.f32.mrf.mxu0
    %v2020 = vadd.f32 0.0, %v2019
    %v2021 = vpop.f32.mrf.mxu0
    %v2022 = vadd.f32 0.0, %v2021
    %2023 = vmatmul.bf16.gmra.mxu0 %v616
    %v2024 = vpop.f32.mrf.mxu0
    %v2025 = vadd.f32 0.0, %v2024
    %v2026 = vpop.f32.mrf.mxu0
    %v2027 = vadd.f32 0.0, %v2026
    %2028 = vmatmul.bf16.gmra.mxu0 %v617
    %v2029 = vpop.f32.mrf.mxu0
    %v2030 = vadd.f32 0.0, %v2029
    %v2031 = vpop.f32.mrf.mxu0
    %v2032 = vadd.f32 0.0, %v2031
    %2033 = vmatmul.bf16.gmra.mxu0 %v618
    %v2034 = vpop.f32.mrf.mxu0
    %v2035 = vadd.f32 0.0, %v2034
    %v2036 = vpop.f32.mrf.mxu0
    %v2037 = vadd.f32 0.0, %v2036
    %2038 = vmatmul.bf16.gmra.mxu0 %v619
    %v2039 = vpop.f32.mrf.mxu0
    %v2040 = vadd.f32 0.0, %v2039
    %v2041 = vpop.f32.mrf.mxu0
    %v2042 = vadd.f32 0.0, %v2041
    %2043 = vmatmul.bf16.gmra.mxu0 %v620
    %v2044 = vpop.f32.mrf.mxu0
    %v2045 = vadd.f32 0.0, %v2044
    %v2046 = vpop.f32.mrf.mxu0
    %v2047 = vadd.f32 0.0, %v2046
    %2048 = vmatmul.bf16.gmra.mxu0 %v621
    %v2049 = vpop.f32.mrf.mxu0
    %v2050 = vadd.f32 0.0, %v2049
    %v2051 = vpop.f32.mrf.mxu0
    %v2052 = vadd.f32 0.0, %v2051
    %2053 = vmatmul.bf16.gmra.mxu0 %v622
    %v2054 = vpop.f32.mrf.mxu0
    %v2055 = vadd.f32 0.0, %v2054
    %v2056 = vpop.f32.mrf.mxu0
    %v2057 = vadd.f32 0.0, %v2056
    %2058 = vmatmul.bf16.gmra.mxu0 %v623
    %v2059 = vpop.f32.mrf.mxu0
    %v2060 = vadd.f32 0.0, %v2059
    %v2061 = vpop.f32.mrf.mxu0
    %v2062 = vadd.f32 0.0, %v2061
    %2063 = vmatmul.bf16.gmra.mxu0 %v624
    %v2064 = vpop.f32.mrf.mxu0
    %v2065 = vadd.f32 0.0, %v2064
    %v2066 = vpop.f32.mrf.mxu0
    %v2067 = vadd.f32 0.0, %v2066
    %2068 = vmatmul.bf16.gmra.mxu0 %v625
    %v2069 = vpop.f32.mrf.mxu0
    %v2070 = vadd.f32 0.0, %v2069
    %v2071 = vpop.f32.mrf.mxu0
    %v2072 = vadd.f32 0.0, %v2071
    %2073 = vdwg.mxu0
    %v2074 = vmax.f32 %v1906, %v1908
    %v2075 = vmax.f32 %v2074, %v1911
    %v2076 = vmax.f32 %v2075, %v1913
    %v2077 = vmax.f32 %v2076, %v1916
    %v2078 = vmax.f32 %v2077, %v1918
    %v2079 = vmax.f32 %v2078, %v1921
    %v2080 = vmax.f32 %v2079, %v1923
    %v2081 = vmax.f32 %v2080, %v1926
    %v2082 = vmax.f32 %v2081, %v1928
    %v2083 = vmax.f32 %v2082, %v1931
    %v2084 = vmax.f32 %v2083, %v1933
    %v2085 = vmax.f32 %v2084, %v1936
    %v2086 = vmax.f32 %v2085, %v1938
    %v2087 = vmax.f32 %v2086, %v1941
    %v2088 = vmax.f32 %v2087, %v1943
    %v2089 = vrot.slane %v2088, 4
    %v2090 = vmax.f32 %v2088, %v2089
    %v2091 = vrot.slane %v2090, 2
    %v2092 = vmax.f32 %v2090, %v2091
    %v2093 = vrot.slane %v2092, 1
    %v2094 = vmax.f32 %v2092, %v2093
    %v2095 = vmax.f32 %v1995, %v1997
    %v2096 = vmax.f32 %v2095, %v2000
    %v2097 = vmax.f32 %v2096, %v2002
    %v2098 = vmax.f32 %v2097, %v2005
    %v2099 = vmax.f32 %v2098, %v2007
    %v2100 = vmax.f32 %v2099, %v2010
    %v2101 = vmax.f32 %v2100, %v2012
    %v2102 = vmax.f32 %v2101, %v2015
    %v2103 = vmax.f32 %v2102, %v2017
    %v2104 = vmax.f32 %v2103, %v2020
    %v2105 = vmax.f32 %v2104, %v2022
    %v2106 = vmax.f32 %v2105, %v2025
    %v2107 = vmax.f32 %v2106, %v2027
    %v2108 = vmax.f32 %v2107, %v2030
    %v2109 = vmax.f32 %v2108, %v2032
    %v2110 = vrot.slane %v2109, 4
    %v2111 = vmax.f32 %v2109, %v2110
    %v2112 = vrot.slane %v2111, 2
    %v2113 = vmax.f32 %v2111, %v2112
    %v2114 = vrot.slane %v2113, 1
    %v2115 = vmax.f32 %v2113, %v2114
    %v2116 = vmax.f32 %v1946, %v1948
    %v2117 = vmax.f32 %v2116, %v1951
    %v2118 = vmax.f32 %v2117, %v1953
    %v2119 = vmax.f32 %v2118, %v1956
    %v2120 = vmax.f32 %v2119, %v1958
    %v2121 = vmax.f32 %v2120, %v1961
    %v2122 = vmax.f32 %v2121, %v1963
    %v2123 = vmax.f32 %v2122, %v1966
    %v2124 = vmax.f32 %v2123, %v1968
    %v2125 = vmax.f32 %v2124, %v1971
    %v2126 = vmax.f32 %v2125, %v1973
    %v2127 = vmax.f32 %v2126, %v1976
    %v2128 = vmax.f32 %v2127, %v1978
    %v2129 = vmax.f32 %v2128, %v1981
    %v2130 = vmax.f32 %v2129, %v1983
    %v2131 = vrot.slane %v2130, 4
    %v2132 = vmax.f32 %v2130, %v2131
    %v2133 = vrot.slane %v2132, 2
    %v2134 = vmax.f32 %v2132, %v2133
    %v2135 = vrot.slane %v2134, 1
    %v2136 = vmax.f32 %v2134, %v2135
    %v2137 = vmax.f32 %v2035, %v2037
    %v2138 = vmax.f32 %v2137, %v2040
    %v2139 = vmax.f32 %v2138, %v2042
    %v2140 = vmax.f32 %v2139, %v2045
    %v2141 = vmax.f32 %v2140, %v2047
    %v2142 = vmax.f32 %v2141, %v2050
    %v2143 = vmax.f32 %v2142, %v2052
    %v2144 = vmax.f32 %v2143, %v2055
    %v2145 = vmax.f32 %v2144, %v2057
    %v2146 = vmax.f32 %v2145, %v2060
    %v2147 = vmax.f32 %v2146, %v2062
    %v2148 = vmax.f32 %v2147, %v2065
    %v2149 = vmax.f32 %v2148, %v2067
    %v2150 = vmax.f32 %v2149, %v2070
    %v2151 = vmax.f32 %v2150, %v2072
    %v2152 = vrot.slane %v2151, 4
    %v2153 = vmax.f32 %v2151, %v2152
    %v2154 = vrot.slane %v2153, 2
    %v2155 = vmax.f32 %v2153, %v2154
    %v2156 = vrot.slane %v2155, 1
    %v2157 = vmax.f32 %v2155, %v2156
    %v2158 = vld [vmem:[%s6 + $0x6] sm:$0x3]
    %v2160 = vperm.slane %v2158, 0
    %v2161 = vperm.slane %v2158, 1
    %v2164 = vadd.f32 %v2094, %v2160
    %v2165 = vadd.f32 %v2115, %v2161
    %v2166 = vadd.f32 %v2136, %v2160
    %v2167 = vadd.f32 %v2157, %v2161
    %v2168 = vmax.f32 %v2164, 0.0
    %v2169 = vmax.f32 %v2165, 0.0
    %v2170 = vmax.f32 %v2166, 0.0
    %v2171 = vmax.f32 %v2167, 0.0
    %v2176 = vrot.slane %v2169, 6
    %v2177 = vrot.slane %v2171, 6
    %v2178 = vsel %vm1004, %v2168, %v2176
    %v2179 = vsel %vm1004, %v2170, %v2177
    %v2180 = vsel %vm1007, %v2178, %v2178
    %v2181 = vsel %vm1009, %v2178, %v2180
    %v2182 = vrot.slane %v2179, 7
    %v2183 = vsel %vm1012, %v2182, %v2181
    %v2184 = vsel %vm1014, %v2182, %v2183
    %v2185 = vsel %vm1016, %v2182, %v2184
    %v2186 = vsel %vm1018, %v2182, %v2185
    %2188 = vst [vmem:[#allocation5 + $0xc] sm:$0xf] %v2186
    // Predicated region
    $region34: #{tpu_custom_call.1} parent=1 // pred_check
      _
    $region35: #{tpu_custom_call.1} parent=1 // pred_check_branch
      %2190 = sbr.rel (0) target = $region37
    $region36: #{tpu_custom_call.1} parent=1 // pred_region
      %2192 = vsyncadd [#allocation4], 0
      %s2194 = sshll.u32 [#allocation5], 4
      %s2195 = int_to_ptr.vmem [resolvable:$true] %s2194
      %s2196 = sshll.u32 %s7, 4
      %s2197 = int_to_ptr.hbm [resolvable:$true] %s2196
      %2199 = dma.vmem_to_hbm [thread:$0]  %s2195, 256, %s2197, [#allocation4]
    $region37: #{tpu_custom_call.1} parent=1 // pred_fallthru
      _
    // Predicated region
    $region38: #{tpu_custom_call.1} parent=1 // pred_check
      _
    $region39: #{tpu_custom_call.1} parent=1 // pred_check_branch
      %2201 = sbr.rel (0) target = $region41
    $region40: #{tpu_custom_call.1} parent=1 // pred_region
      %2203 = dma.done [#allocation4], 256
    $region41: #{tpu_custom_call.1} parent=1 // pred_fallthru
      _
    %2204 = vsyncpa [#allocation3], 1
    %2205 = vsyncpa [#allocation4], 1

</llo_original>
